<compile_context>
chip_gen: v6e
topology: v6e:2x2x1
jax: 0.10.0
libtpu: 0.0.40
codegen_flags: <defaults>
</compile_context>

<pallas_src>
import functools

import jax
import jax.numpy as jnp
from jax.experimental import pallas as pl
from jax.experimental.pallas import tpu as pltpu

# ----------------------- mini-DistilBERT configuration ----------------------
VOCAB = 100
VOCAB_PAD = 128          # pad embedding table rows so the one-hot gather is lane-dense
MAX_POS = 16
HIDDEN = 32
N_HEADS = 2
HEAD_DIM = HIDDEN // N_HEADS
FFN = 64
N_LAYERS = 2
N_CLASSES = 4
N_OUT_PAD = 128          # lane-dense classifier output; sliced to N_CLASSES in wrapper
OUT_ROWS = 8             # sublane-dense output rows; sliced to B in wrapper
QKV = 3 * HIDDEN
QKV_PAD = 128            # fused QKV weight padded to 128 output lanes
LN_EPS = 1e-12           # matches HF DistilBERT; see correctness note in review
NEG_INF = -1e9


# ------------------------------- fused kernel --------------------------------
def _layernorm(x, g, b):
    mean = jnp.mean(x, axis=-1, keepdims=True)
    var = jnp.mean((x - mean) ** 2, axis=-1, keepdims=True)
    return (x - mean) * jax.lax.rsqrt(var + LN_EPS) * g + b


def _fused_forward_kernel(
    ids_ref, mask_ref, wemb_ref, pemb_ref, emb_g_ref, emb_b_ref,
    wqkv_ref, bqkv_ref, wo_ref, bo_ref, ln1_g_ref, ln1_b_ref,
    w1_ref, b1_ref, w2_ref, b2_ref, ln2_g_ref, ln2_b_ref,
    fc_w_ref, fc_b_ref,
    out_ref, *, batch, seq,
):
    bs = batch * seq

    # --- token embedding gather as a one-hot matmul (no data-dependent addressing) ---
    ids = ids_ref[...]                                                   # [BS, 1] int32
    vocab_iota = jax.lax.broadcasted_iota(jnp.int32, (bs, VOCAB_PAD), 1)
    onehot = (vocab_iota == ids).astype(jnp.float32)                     # [BS, 128]
    tok = jnp.dot(onehot, wemb_ref[...], preferred_element_type=jnp.float32)   # [BS, H]

    # --- positional embedding + embedding LayerNorm ---
    pos = pemb_ref[0:seq, :]                                             # [S, H]
    pos_full = jnp.concatenate([pos] * batch, axis=0)                    # [BS, H]
    x = _layernorm(tok + pos_full, emb_g_ref[...], emb_b_ref[...])       # [BS, H]

    # --- block-diagonal additive attention bias, built once, reused by all layers ---
    row = jax.lax.broadcasted_iota(jnp.int32, (bs, bs), 0)
    col = jax.lax.broadcasted_iota(jnp.int32, (bs, bs), 1)
    same = None
    for b in range(batch):          # static unroll; pure VPU compares (no int divide)
        blk = ((row >= b * seq) & (row < (b + 1) * seq)
               & (col >= b * seq) & (col < (b + 1) * seq))
        same = blk if same is None else (same | blk)
    key_ok = same & (mask_ref[...] > 0)                                  # [BS, BS]
    bias = jnp.where(key_ok, 0.0, NEG_INF).astype(jnp.float32)

    for li in range(N_LAYERS):      # static unroll: whole stack in one kernel
        # ---------------- multi-head self-attention ----------------
        # fused QKV: one [BS,H] @ [H,128] matmul; softmax scale folded into Q columns
        qkv = jnp.dot(x, wqkv_ref[li], preferred_element_type=jnp.float32) + bqkv_ref[li]
        ctx_heads = []
        for h in range(N_HEADS):    # static unroll over heads (lane slices of qkv)
            q = qkv[:, h * HEAD_DIM:(h + 1) * HEAD_DIM]
            k = qkv[:, HIDDEN + h * HEAD_DIM: HIDDEN + (h + 1) * HEAD_DIM]
            v = qkv[:, 2 * HIDDEN + h * HEAD_DIM: 2 * HIDDEN + (h + 1) * HEAD_DIM]
            # q @ k^T without materializing the transpose (contract head dim of both)
            scores = jax.lax.dot_general(
                q, k, (((1,), (1,)), ((), ())),
                preferred_element_type=jnp.float32) + bias               # [BS, BS]
            m = jnp.max(scores, axis=-1, keepdims=True)
            p = jnp.exp(scores - m)
            p = p * pl.reciprocal(jnp.sum(p, axis=-1, keepdims=True), approx=True)
            ctx_heads.append(jnp.dot(p, v, preferred_element_type=jnp.float32))
        ctx = jnp.concatenate(ctx_heads, axis=1)                         # [BS, H]
        # single o_proj: equals o_proj(concat(heads))
        attn = jnp.dot(ctx, wo_ref[li], preferred_element_type=jnp.float32) + bo_ref[li]
        x = _layernorm(attn + x, ln1_g_ref[li], ln1_b_ref[li])

        # ---------------------- feed-forward ----------------------
        h1 = jnp.dot(x, w1_ref[li], preferred_element_type=jnp.float32) + b1_ref[li]
        # TODO(synk): HF DistilBERT uses exact (erf) GELU; tanh approximation kept
        # here to guarantee Mosaic lowering (tiny numeric drift with real weights).
        h1 = jax.nn.gelu(h1, approximate=True)
        h2 = jnp.dot(h1, w2_ref[li], preferred_element_type=jnp.float32) + b2_ref[li]
        x = _layernorm(h2 + x, ln2_g_ref[li], ln2_b_ref[li])

    # --- CLS pool (rows b*seq are sublane-aligned) + fc + sigmoid, full-tile store ---
    cls_rows = [x[b * seq: b * seq + 1, :] for b in range(batch)]
    if batch < OUT_ROWS:
        cls_rows.append(jnp.zeros((OUT_ROWS - batch, HIDDEN), jnp.float32))
    pooled = jnp.concatenate(cls_rows, axis=0)                           # [8, H]
    logits = jnp.dot(pooled, fc_w_ref[...], preferred_element_type=jnp.float32) + fc_b_ref[...]
    out_ref[...] = jax.nn.sigmoid(logits).astype(out_ref.dtype)          # [8, 128] unmasked


# ------------------------------ parameter setup ------------------------------
def init_params(key):
    def dense(key, shape):
        return (0.02 * jax.random.normal(key, shape)).astype(jnp.float32)

    keys = jax.random.split(key, 4 + N_LAYERS)
    params = {
        "word_emb": dense(keys[0], (VOCAB, HIDDEN)),
        "pos_emb": dense(keys[1], (MAX_POS, HIDDEN)),
        "emb_ln_g": jnp.ones((HIDDEN,), jnp.float32),
        "emb_ln_b": jnp.zeros((HIDDEN,), jnp.float32),
        "fc_w": dense(keys[2], (HIDDEN, N_CLASSES)),
        "fc_b": jnp.zeros((N_CLASSES,), jnp.float32),
        "layers": [],
    }
    for li in range(N_LAYERS):
        lk = jax.random.split(keys[4 + li], 6)
        params["layers"].append({
            "q_w": dense(lk[0], (HIDDEN, HIDDEN)), "q_b": jnp.zeros((HIDDEN,), jnp.float32),
            "k_w": dense(lk[1], (HIDDEN, HIDDEN)), "k_b": jnp.zeros((HIDDEN,), jnp.float32),
            "v_w": dense(lk[2], (HIDDEN, HIDDEN)), "v_b": jnp.zeros((HIDDEN,), jnp.float32),
            "o_w": dense(lk[3], (HIDDEN, HIDDEN)), "o_b": jnp.zeros((HIDDEN,), jnp.float32),
            "ln1_g": jnp.ones((HIDDEN,), jnp.float32), "ln1_b": jnp.zeros((HIDDEN,), jnp.float32),
            "lin1_w": dense(lk[4], (HIDDEN, FFN)), "lin1_b": jnp.zeros((FFN,), jnp.float32),
            "lin2_w": dense(lk[5], (FFN, HIDDEN)), "lin2_b": jnp.zeros((HIDDEN,), jnp.float32),
            "ln2_g": jnp.ones((HIDDEN,), jnp.float32), "ln2_b": jnp.zeros((HIDDEN,), jnp.float32),
        })
    return params


def pack_params(p):
    """Pack torch-style per-layer weights for the fused kernel:
    * word_emb padded to 128 rows (lane-dense one-hot gather),
    * Q|K|V fused into one [L, H, 128] weight (1/sqrt(Dh) folded into Q columns),
    * classifier head padded to 128 output lanes."""
    L = N_LAYERS

    def stack(name):
        return jnp.stack([p["layers"][l][name] for l in range(L)])

    scale = 1.0 / (HEAD_DIM ** 0.5)
    wqkv = jnp.concatenate([stack("q_w") * scale, stack("k_w"), stack("v_w")], axis=2)   # [L,H,3H]
    bqkv = jnp.concatenate([stack("q_b") * scale, stack("k_b"), stack("v_b")], axis=1)   # [L,3H]
    return {
        "word_emb": jnp.pad(p["word_emb"], ((0, VOCAB_PAD - VOCAB), (0, 0))),
        "pos_emb": p["pos_emb"],
        "emb_g": p["emb_ln_g"].reshape(1, HIDDEN),
        "emb_b": p["emb_ln_b"].reshape(1, HIDDEN),
        "wqkv": jnp.pad(wqkv, ((0, 0), (0, 0), (0, QKV_PAD - QKV))),
        "bqkv": jnp.pad(bqkv, ((0, 0), (0, QKV_PAD - QKV))).reshape(L, 1, QKV_PAD),
        "wo": stack("o_w"),                                      # [L, H, H]
        "bo": stack("o_b").reshape(L, 1, HIDDEN),
        "ln1_g": stack("ln1_g").reshape(L, 1, HIDDEN),
        "ln1_b": stack("ln1_b").reshape(L, 1, HIDDEN),
        "w1": stack("lin1_w"), "b1": stack("lin1_b").reshape(L, 1, FFN),
        "w2": stack("lin2_w"), "b2": stack("lin2_b").reshape(L, 1, HIDDEN),
        "ln2_g": stack("ln2_g").reshape(L, 1, HIDDEN),
        "ln2_b": stack("ln2_b").reshape(L, 1, HIDDEN),
        "fc_w": jnp.zeros((HIDDEN, N_OUT_PAD), jnp.float32).at[:, :N_CLASSES].set(p["fc_w"]),
        "fc_b": jnp.zeros((1, N_OUT_PAD), jnp.float32).at[0, :N_CLASSES].set(p["fc_b"]),
    }


# ------------------------------- forward pass --------------------------------
def emotion_classifier_forward(packed, input_ids, attention_mask):
    B, S = input_ids.shape

    # Only remaining wrapper-side glue: two trivial reshapes of the int inputs.
    ids = input_ids.reshape(B * S, 1).astype(jnp.int32)          # [BS, 1]  (sublane column)
    mask = attention_mask.reshape(1, B * S).astype(jnp.int32)    # [1, BS]  (lane row)
    # NOTE: all Dropout layers (incl. self.drop, p=0.3) are identity at inference.

    kernel = functools.partial(_fused_forward_kernel, batch=B, seq=S)
    operands = (
        ids, mask, packed["word_emb"], packed["pos_emb"], packed["emb_g"], packed["emb_b"],
        packed["wqkv"], packed["bqkv"], packed["wo"], packed["bo"],
        packed["ln1_g"], packed["ln1_b"],
        packed["w1"], packed["b1"], packed["w2"], packed["b2"],
        packed["ln2_g"], packed["ln2_b"],
        packed["fc_w"], packed["fc_b"],
    )
    vmem = pl.BlockSpec(memory_space=pltpu.MemorySpace.VMEM)     # everything VMEM-resident
    # TODO(synk): for the real 66M-param checkpoint this grid-less all-resident design
    # must become a per-layer grid with streamed weight BlockSpecs (VMEM limits, esp. v7x).
    probs_pad = pl.pallas_call(
        kernel,
        out_shape=jax.ShapeDtypeStruct((OUT_ROWS, N_OUT_PAD), jnp.float32),
        in_specs=[vmem] * len(operands),
        out_specs=vmem,
    )(*operands)
    return probs_pad[:B, :N_CLASSES]                             # (B, N_CLASSES) probabilities


# ----------------------------------- main ------------------------------------
if __name__ == "__main__":
    key = jax.random.PRNGKey(0)
    pkey, ikey = jax.random.split(key)
    packed = pack_params(init_params(pkey))

    B, S = 2, 8
    input_ids = jax.random.randint(ikey, (B, S), 0, VOCAB, dtype=jnp.int32)
    attention_mask = jnp.array(
        [[1, 1, 1, 1, 1, 1, 1, 1],
         [1, 1, 1, 1, 1, 0, 0, 0]], dtype=jnp.int32)

    fwd = jax.jit(emotion_classifier_forward)
    out = jax.block_until_ready(fwd(packed, input_ids, attention_mask))

    assert out.shape == (B, N_CLASSES)
    assert bool(jnp.all(jnp.isfinite(out)))
    assert bool(jnp.all((out >= 0.0) & (out <= 1.0)))
    print("KERNEL_OK")
</pallas_src>

<mosaic_0001>
module attributes {stable_mosaic.version = 11 : i64} {
  func.func @_fused_forward_kernel(%arg0: memref<16x1xi32, #tpu.memory_space<vmem>>, %arg1: memref<1x16xi32, #tpu.memory_space<vmem>>, %arg2: memref<128x32xf32, #tpu.memory_space<vmem>>, %arg3: memref<16x32xf32, #tpu.memory_space<vmem>>, %arg4: memref<1x32xf32, #tpu.memory_space<vmem>>, %arg5: memref<1x32xf32, #tpu.memory_space<vmem>>, %arg6: memref<2x32x128xf32, #tpu.memory_space<vmem>>, %arg7: memref<2x1x128xf32, #tpu.memory_space<vmem>>, %arg8: memref<2x32x32xf32, #tpu.memory_space<vmem>>, %arg9: memref<2x1x32xf32, #tpu.memory_space<vmem>>, %arg10: memref<2x1x32xf32, #tpu.memory_space<vmem>>, %arg11: memref<2x1x32xf32, #tpu.memory_space<vmem>>, %arg12: memref<2x32x64xf32, #tpu.memory_space<vmem>>, %arg13: memref<2x1x64xf32, #tpu.memory_space<vmem>>, %arg14: memref<2x64x32xf32, #tpu.memory_space<vmem>>, %arg15: memref<2x1x32xf32, #tpu.memory_space<vmem>>, %arg16: memref<2x1x32xf32, #tpu.memory_space<vmem>>, %arg17: memref<2x1x32xf32, #tpu.memory_space<vmem>>, %arg18: memref<32x128xf32, #tpu.memory_space<vmem>>, %arg19: memref<1x128xf32, #tpu.memory_space<vmem>>, %arg20: memref<8x128xf32, #tpu.memory_space<vmem>>) attributes {dimension_semantics = [], scalar_prefetch = 0 : i64, scratch_operands = 0 : i64, tpu.core_type = #tpu.core_type<tc>} {
    %c0 = arith.constant 0 : index
    %c0_0 = arith.constant 0 : index
    %0 = vector.load %arg0[%c0, %c0_0] : memref<16x1xi32, #tpu.memory_space<vmem>>, vector<16x1xi32>
    %1 = tpu.iota {dimensions = array<i32: 1>} : vector<16x128xi32>
    %2 = vector.broadcast %0 : vector<16x1xi32> to vector<16x128xi32>
    %3 = arith.cmpi eq, %1, %2 : vector<16x128xi32>
    %4 = arith.extui %3 : vector<16x128xi1> to vector<16x128xi32>
    %5 = arith.sitofp %4 : vector<16x128xi32> to vector<16x128xf32>
    %c0_1 = arith.constant 0 : index
    %c0_2 = arith.constant 0 : index
    %6 = vector.load %arg2[%c0_1, %c0_2] : memref<128x32xf32, #tpu.memory_space<vmem>>, vector<128x32xf32>
    %cst = arith.constant dense<0.000000e+00> : vector<16x32xf32>
    %7 = tpu.matmul %5, %6, %cst {dimension_numbers = #tpu.dot_dimension_numbers<[1], [0], [0], [1], [0, 0, 1, 1], [], []>} : vector<16x128xf32>, vector<128x32xf32>, vector<16x32xf32> -> vector<16x32xf32>
    %c0_3 = arith.constant 0 : index
    %c0_4 = arith.constant 0 : index
    %8 = vector.load %arg3[%c0_3, %c0_4] : memref<16x32xf32, #tpu.memory_space<vmem>>, vector<8x32xf32>
    %9 = tpu.concatenate %8, %8 in 0 : vector<8x32xf32>, vector<8x32xf32> -> vector<16x32xf32>
    %10 = arith.addf %7, %9 : vector<16x32xf32>
    %c0_5 = arith.constant 0 : index
    %c0_6 = arith.constant 0 : index
    %11 = vector.load %arg4[%c0_5, %c0_6] : memref<1x32xf32, #tpu.memory_space<vmem>>, vector<1x32xf32>
    %c0_7 = arith.constant 0 : index
    %c0_8 = arith.constant 0 : index
    %12 = vector.load %arg5[%c0_7, %c0_8] : memref<1x32xf32, #tpu.memory_space<vmem>>, vector<1x32xf32>
    %cst_9 = arith.constant dense<0.000000e+00> : vector<16xf32>
    %13 = vector.multi_reduction <add>, %10, %cst_9 [1] : vector<16x32xf32> to vector<16xf32>
    %14 = vector.shape_cast %13 : vector<16xf32> to vector<16x1xf32>
    %cst_10 = arith.constant 3.200000e+01 : f32
    %15 = vector.broadcast %cst_10 : f32 to vector<16x1xf32>
    %16 = arith.divf %14, %15 : vector<16x1xf32>
    %17 = vector.broadcast %16 : vector<16x1xf32> to vector<16x32xf32>
    %18 = arith.subf %10, %17 : vector<16x32xf32>
    %19 = arith.mulf %18, %18 : vector<16x32xf32>
    %cst_11 = arith.constant dense<0.000000e+00> : vector<16xf32>
    %20 = vector.multi_reduction <add>, %19, %cst_11 [1] : vector<16x32xf32> to vector<16xf32>
    %21 = vector.shape_cast %20 : vector<16xf32> to vector<16x1xf32>
    %cst_12 = arith.constant 3.200000e+01 : f32
    %22 = vector.broadcast %cst_12 : f32 to vector<16x1xf32>
    %23 = arith.divf %21, %22 : vector<16x1xf32>
    %24 = vector.broadcast %16 : vector<16x1xf32> to vector<16x32xf32>
    %25 = arith.subf %10, %24 : vector<16x32xf32>
    %cst_13 = arith.constant 9.99999996E-13 : f32
    %26 = vector.broadcast %cst_13 : f32 to vector<16x1xf32>
    %27 = arith.addf %23, %26 : vector<16x1xf32>
    %28 = math.rsqrt %27 : vector<16x1xf32>
    %29 = vector.broadcast %28 : vector<16x1xf32> to vector<16x32xf32>
    %30 = arith.mulf %25, %29 : vector<16x32xf32>
    %31 = vector.broadcast %11 : vector<1x32xf32> to vector<16x32xf32>
    %32 = arith.mulf %30, %31 : vector<16x32xf32>
    %33 = vector.broadcast %12 : vector<1x32xf32> to vector<16x32xf32>
    %34 = arith.addf %32, %33 : vector<16x32xf32>
    %35 = tpu.iota {dimensions = array<i32: 0>} : vector<16x16xi32>
    %36 = tpu.iota {dimensions = array<i32: 1>} : vector<16x16xi32>
    %c0_i32 = arith.constant 0 : i32
    %37 = vector.broadcast %c0_i32 : i32 to vector<16x16xi32>
    %38 = arith.cmpi sge, %35, %37 : vector<16x16xi32>
    %c8_i32 = arith.constant 8 : i32
    %39 = vector.broadcast %c8_i32 : i32 to vector<16x16xi32>
    %40 = arith.cmpi slt, %35, %39 : vector<16x16xi32>
    %41 = arith.andi %38, %40 : vector<16x16xi1>
    %c0_i32_14 = arith.constant 0 : i32
    %42 = vector.broadcast %c0_i32_14 : i32 to vector<16x16xi32>
    %43 = arith.cmpi sge, %36, %42 : vector<16x16xi32>
    %44 = arith.andi %41, %43 : vector<16x16xi1>
    %c8_i32_15 = arith.constant 8 : i32
    %45 = vector.broadcast %c8_i32_15 : i32 to vector<16x16xi32>
    %46 = arith.cmpi slt, %36, %45 : vector<16x16xi32>
    %47 = arith.andi %44, %46 : vector<16x16xi1>
    %c8_i32_16 = arith.constant 8 : i32
    %48 = vector.broadcast %c8_i32_16 : i32 to vector<16x16xi32>
    %49 = arith.cmpi sge, %35, %48 : vector<16x16xi32>
    %c16_i32 = arith.constant 16 : i32
    %50 = vector.broadcast %c16_i32 : i32 to vector<16x16xi32>
    %51 = arith.cmpi slt, %35, %50 : vector<16x16xi32>
    %52 = arith.andi %49, %51 : vector<16x16xi1>
    %c8_i32_17 = arith.constant 8 : i32
    %53 = vector.broadcast %c8_i32_17 : i32 to vector<16x16xi32>
    %54 = arith.cmpi sge, %36, %53 : vector<16x16xi32>
    %55 = arith.andi %52, %54 : vector<16x16xi1>
    %c16_i32_18 = arith.constant 16 : i32
    %56 = vector.broadcast %c16_i32_18 : i32 to vector<16x16xi32>
    %57 = arith.cmpi slt, %36, %56 : vector<16x16xi32>
    %58 = arith.andi %55, %57 : vector<16x16xi1>
    %59 = arith.ori %47, %58 : vector<16x16xi1>
    %c0_19 = arith.constant 0 : index
    %c0_20 = arith.constant 0 : index
    %60 = vector.load %arg1[%c0_19, %c0_20] : memref<1x16xi32, #tpu.memory_space<vmem>>, vector<1x16xi32>
    %c0_i32_21 = arith.constant 0 : i32
    %61 = vector.broadcast %c0_i32_21 : i32 to vector<1x16xi32>
    %62 = arith.cmpi sgt, %60, %61 : vector<1x16xi32>
    %63 = vector.broadcast %62 : vector<1x16xi1> to vector<16x16xi1>
    %64 = arith.andi %59, %63 : vector<16x16xi1>
    %cst_22 = arith.constant 0.000000e+00 : f32
    %cst_23 = arith.constant -1.000000e+09 : f32
    %65 = vector.broadcast %cst_22 : f32 to vector<16x16xf32>
    %66 = vector.broadcast %cst_23 : f32 to vector<16x16xf32>
    %67 = arith.select %64, %65, %66 : vector<16x16xi1>, vector<16x16xf32>
    %c0_24 = arith.constant 0 : index
    %c0_25 = arith.constant 0 : index
    %c0_26 = arith.constant 0 : index
    %68 = vector.load %arg6[%c0_24, %c0_25, %c0_26] : memref<2x32x128xf32, #tpu.memory_space<vmem>>, vector<1x32x128xf32>
    %69 = vector.shape_cast %68 : vector<1x32x128xf32> to vector<32x128xf32>
    %cst_27 = arith.constant dense<0.000000e+00> : vector<16x128xf32>
    %70 = tpu.matmul %34, %69, %cst_27 {dimension_numbers = #tpu.dot_dimension_numbers<[1], [0], [0], [1], [0, 0, 1, 1], [], []>} : vector<16x32xf32>, vector<32x128xf32>, vector<16x128xf32> -> vector<16x128xf32>
    %c0_28 = arith.constant 0 : index
    %c0_29 = arith.constant 0 : index
    %c0_30 = arith.constant 0 : index
    %71 = vector.load %arg7[%c0_28, %c0_29, %c0_30] : memref<2x1x128xf32, #tpu.memory_space<vmem>>, vector<1x1x128xf32>
    %72 = vector.shape_cast %71 : vector<1x1x128xf32> to vector<1x128xf32>
    %73 = vector.broadcast %72 : vector<1x128xf32> to vector<16x128xf32>
    %74 = arith.addf %70, %73 : vector<16x128xf32>
    %75 = vector.extract_strided_slice %74 {offsets = [0, 0], sizes = [16, 16], strides = [1, 1]} : vector<16x128xf32> to vector<16x16xf32>
    %76 = vector.extract_strided_slice %74 {offsets = [0, 32], sizes = [16, 16], strides = [1, 1]} : vector<16x128xf32> to vector<16x16xf32>
    %77 = vector.extract_strided_slice %74 {offsets = [0, 64], sizes = [16, 16], strides = [1, 1]} : vector<16x128xf32> to vector<16x16xf32>
    %cst_31 = arith.constant dense<0.000000e+00> : vector<16x16xf32>
    %78 = tpu.matmul %75, %76, %cst_31 {dimension_numbers = #tpu.dot_dimension_numbers<[1], [1], [0], [0], [0, 0, 1, 0], [], []>} : vector<16x16xf32>, vector<16x16xf32>, vector<16x16xf32> -> vector<16x16xf32>
    %79 = arith.addf %78, %67 : vector<16x16xf32>
    %cst_32 = arith.constant dense<0xFF800000> : vector<16xf32>
    %80 = vector.multi_reduction <maximumf>, %79, %cst_32 [1] : vector<16x16xf32> to vector<16xf32>
    %81 = vector.shape_cast %80 : vector<16xf32> to vector<16x1xf32>
    %82 = vector.broadcast %81 : vector<16x1xf32> to vector<16x16xf32>
    %83 = arith.subf %79, %82 : vector<16x16xf32>
    %84 = math.exp %83 : vector<16x16xf32>
    %cst_33 = arith.constant dense<0.000000e+00> : vector<16xf32>
    %85 = vector.multi_reduction <add>, %84, %cst_33 [1] : vector<16x16xf32> to vector<16xf32>
    %86 = vector.shape_cast %85 : vector<16xf32> to vector<16x1xf32>
    %87 = tpu.reciprocal %86 {approx = true} : vector<16x1xf32> -> vector<16x1xf32>
    %88 = vector.broadcast %87 : vector<16x1xf32> to vector<16x16xf32>
    %89 = arith.mulf %84, %88 : vector<16x16xf32>
    %cst_34 = arith.constant dense<0.000000e+00> : vector<16x16xf32>
    %90 = tpu.matmul %89, %77, %cst_34 {dimension_numbers = #tpu.dot_dimension_numbers<[1], [0], [0], [1], [0, 0, 1, 1], [], []>} : vector<16x16xf32>, vector<16x16xf32>, vector<16x16xf32> -> vector<16x16xf32>
    %91 = vector.extract_strided_slice %74 {offsets = [0, 16], sizes = [16, 16], strides = [1, 1]} : vector<16x128xf32> to vector<16x16xf32>
    %92 = vector.extract_strided_slice %74 {offsets = [0, 48], sizes = [16, 16], strides = [1, 1]} : vector<16x128xf32> to vector<16x16xf32>
    %93 = vector.extract_strided_slice %74 {offsets = [0, 80], sizes = [16, 16], strides = [1, 1]} : vector<16x128xf32> to vector<16x16xf32>
    %cst_35 = arith.constant dense<0.000000e+00> : vector<16x16xf32>
    %94 = tpu.matmul %91, %92, %cst_35 {dimension_numbers = #tpu.dot_dimension_numbers<[1], [1], [0], [0], [0, 0, 1, 0], [], []>} : vector<16x16xf32>, vector<16x16xf32>, vector<16x16xf32> -> vector<16x16xf32>
    %95 = arith.addf %94, %67 : vector<16x16xf32>
    %cst_36 = arith.constant dense<0xFF800000> : vector<16xf32>
    %96 = vector.multi_reduction <maximumf>, %95, %cst_36 [1] : vector<16x16xf32> to vector<16xf32>
    %97 = vector.shape_cast %96 : vector<16xf32> to vector<16x1xf32>
    %98 = vector.broadcast %97 : vector<16x1xf32> to vector<16x16xf32>
    %99 = arith.subf %95, %98 : vector<16x16xf32>
    %100 = math.exp %99 : vector<16x16xf32>
    %cst_37 = arith.constant dense<0.000000e+00> : vector<16xf32>
    %101 = vector.multi_reduction <add>, %100, %cst_37 [1] : vector<16x16xf32> to vector<16xf32>
    %102 = vector.shape_cast %101 : vector<16xf32> to vector<16x1xf32>
    %103 = tpu.reciprocal %102 {approx = true} : vector<16x1xf32> -> vector<16x1xf32>
    %104 = vector.broadcast %103 : vector<16x1xf32> to vector<16x16xf32>
    %105 = arith.mulf %100, %104 : vector<16x16xf32>
    %cst_38 = arith.constant dense<0.000000e+00> : vector<16x16xf32>
    %106 = tpu.matmul %105, %93, %cst_38 {dimension_numbers = #tpu.dot_dimension_numbers<[1], [0], [0], [1], [0, 0, 1, 1], [], []>} : vector<16x16xf32>, vector<16x16xf32>, vector<16x16xf32> -> vector<16x16xf32>
    %107 = tpu.concatenate %90, %106 in 1 : vector<16x16xf32>, vector<16x16xf32> -> vector<16x32xf32>
    %c0_39 = arith.constant 0 : index
    %c0_40 = arith.constant 0 : index
    %c0_41 = arith.constant 0 : index
    %108 = vector.load %arg8[%c0_39, %c0_40, %c0_41] : memref<2x32x32xf32, #tpu.memory_space<vmem>>, vector<1x32x32xf32>
    %109 = vector.shape_cast %108 : vector<1x32x32xf32> to vector<32x32xf32>
    %cst_42 = arith.constant dense<0.000000e+00> : vector<16x32xf32>
    %110 = tpu.matmul %107, %109, %cst_42 {dimension_numbers = #tpu.dot_dimension_numbers<[1], [0], [0], [1], [0, 0, 1, 1], [], []>} : vector<16x32xf32>, vector<32x32xf32>, vector<16x32xf32> -> vector<16x32xf32>
    %c0_43 = arith.constant 0 : index
    %c0_44 = arith.constant 0 : index
    %c0_45 = arith.constant 0 : index
    %111 = vector.load %arg9[%c0_43, %c0_44, %c0_45] : memref<2x1x32xf32, #tpu.memory_space<vmem>>, vector<1x1x32xf32>
    %112 = vector.shape_cast %111 : vector<1x1x32xf32> to vector<1x32xf32>
    %113 = vector.broadcast %112 : vector<1x32xf32> to vector<16x32xf32>
    %114 = arith.addf %110, %113 : vector<16x32xf32>
    %115 = arith.addf %114, %34 : vector<16x32xf32>
    %c0_46 = arith.constant 0 : index
    %c0_47 = arith.constant 0 : index
    %c0_48 = arith.constant 0 : index
    %116 = vector.load %arg10[%c0_46, %c0_47, %c0_48] : memref<2x1x32xf32, #tpu.memory_space<vmem>>, vector<1x1x32xf32>
    %117 = vector.shape_cast %116 : vector<1x1x32xf32> to vector<1x32xf32>
    %c0_49 = arith.constant 0 : index
    %c0_50 = arith.constant 0 : index
    %c0_51 = arith.constant 0 : index
    %118 = vector.load %arg11[%c0_49, %c0_50, %c0_51] : memref<2x1x32xf32, #tpu.memory_space<vmem>>, vector<1x1x32xf32>
    %119 = vector.shape_cast %118 : vector<1x1x32xf32> to vector<1x32xf32>
    %cst_52 = arith.constant dense<0.000000e+00> : vector<16xf32>
    %120 = vector.multi_reduction <add>, %115, %cst_52 [1] : vector<16x32xf32> to vector<16xf32>
    %121 = vector.shape_cast %120 : vector<16xf32> to vector<16x1xf32>
    %cst_53 = arith.constant 3.200000e+01 : f32
    %122 = vector.broadcast %cst_53 : f32 to vector<16x1xf32>
    %123 = arith.divf %121, %122 : vector<16x1xf32>
    %124 = vector.broadcast %123 : vector<16x1xf32> to vector<16x32xf32>
    %125 = arith.subf %115, %124 : vector<16x32xf32>
    %126 = arith.mulf %125, %125 : vector<16x32xf32>
    %cst_54 = arith.constant dense<0.000000e+00> : vector<16xf32>
    %127 = vector.multi_reduction <add>, %126, %cst_54 [1] : vector<16x32xf32> to vector<16xf32>
    %128 = vector.shape_cast %127 : vector<16xf32> to vector<16x1xf32>
    %cst_55 = arith.constant 3.200000e+01 : f32
    %129 = vector.broadcast %cst_55 : f32 to vector<16x1xf32>
    %130 = arith.divf %128, %129 : vector<16x1xf32>
    %131 = vector.broadcast %123 : vector<16x1xf32> to vector<16x32xf32>
    %132 = arith.subf %115, %131 : vector<16x32xf32>
    %cst_56 = arith.constant 9.99999996E-13 : f32
    %133 = vector.broadcast %cst_56 : f32 to vector<16x1xf32>
    %134 = arith.addf %130, %133 : vector<16x1xf32>
    %135 = math.rsqrt %134 : vector<16x1xf32>
    %136 = vector.broadcast %135 : vector<16x1xf32> to vector<16x32xf32>
    %137 = arith.mulf %132, %136 : vector<16x32xf32>
    %138 = vector.broadcast %117 : vector<1x32xf32> to vector<16x32xf32>
    %139 = arith.mulf %137, %138 : vector<16x32xf32>
    %140 = vector.broadcast %119 : vector<1x32xf32> to vector<16x32xf32>
    %141 = arith.addf %139, %140 : vector<16x32xf32>
    %c0_57 = arith.constant 0 : index
    %c0_58 = arith.constant 0 : index
    %c0_59 = arith.constant 0 : index
    %142 = vector.load %arg12[%c0_57, %c0_58, %c0_59] : memref<2x32x64xf32, #tpu.memory_space<vmem>>, vector<1x32x64xf32>
    %143 = vector.shape_cast %142 : vector<1x32x64xf32> to vector<32x64xf32>
    %cst_60 = arith.constant dense<0.000000e+00> : vector<16x64xf32>
    %144 = tpu.matmul %141, %143, %cst_60 {dimension_numbers = #tpu.dot_dimension_numbers<[1], [0], [0], [1], [0, 0, 1, 1], [], []>} : vector<16x32xf32>, vector<32x64xf32>, vector<16x64xf32> -> vector<16x64xf32>
    %c0_61 = arith.constant 0 : index
    %c0_62 = arith.constant 0 : index
    %c0_63 = arith.constant 0 : index
    %145 = vector.load %arg13[%c0_61, %c0_62, %c0_63] : memref<2x1x64xf32, #tpu.memory_space<vmem>>, vector<1x1x64xf32>
    %146 = vector.shape_cast %145 : vector<1x1x64xf32> to vector<1x64xf32>
    %147 = vector.broadcast %146 : vector<1x64xf32> to vector<16x64xf32>
    %148 = arith.addf %144, %147 : vector<16x64xf32>
    %149 = arith.mulf %148, %148 : vector<16x64xf32>
    %150 = arith.mulf %148, %149 : vector<16x64xf32>
    %cst_64 = arith.constant 4.471500e-02 : f32
    %151 = vector.broadcast %cst_64 : f32 to vector<16x64xf32>
    %152 = arith.mulf %151, %150 : vector<16x64xf32>
    %153 = arith.addf %148, %152 : vector<16x64xf32>
    %cst_65 = arith.constant 0.797884583 : f32
    %154 = vector.broadcast %cst_65 : f32 to vector<16x64xf32>
    %155 = arith.mulf %154, %153 : vector<16x64xf32>
    %156 = math.tanh %155 : vector<16x64xf32>
    %cst_66 = arith.constant 1.000000e+00 : f32
    %157 = vector.broadcast %cst_66 : f32 to vector<16x64xf32>
    %158 = arith.addf %157, %156 : vector<16x64xf32>
    %cst_67 = arith.constant 5.000000e-01 : f32
    %159 = vector.broadcast %cst_67 : f32 to vector<16x64xf32>
    %160 = arith.mulf %159, %158 : vector<16x64xf32>
    %161 = arith.mulf %148, %160 : vector<16x64xf32>
    %c0_68 = arith.constant 0 : index
    %c0_69 = arith.constant 0 : index
    %c0_70 = arith.constant 0 : index
    %162 = vector.load %arg14[%c0_68, %c0_69, %c0_70] : memref<2x64x32xf32, #tpu.memory_space<vmem>>, vector<1x64x32xf32>
    %163 = vector.shape_cast %162 : vector<1x64x32xf32> to vector<64x32xf32>
    %cst_71 = arith.constant dense<0.000000e+00> : vector<16x32xf32>
    %164 = tpu.matmul %161, %163, %cst_71 {dimension_numbers = #tpu.dot_dimension_numbers<[1], [0], [0], [1], [0, 0, 1, 1], [], []>} : vector<16x64xf32>, vector<64x32xf32>, vector<16x32xf32> -> vector<16x32xf32>
    %c0_72 = arith.constant 0 : index
    %c0_73 = arith.constant 0 : index
    %c0_74 = arith.constant 0 : index
    %165 = vector.load %arg15[%c0_72, %c0_73, %c0_74] : memref<2x1x32xf32, #tpu.memory_space<vmem>>, vector<1x1x32xf32>
    %166 = vector.shape_cast %165 : vector<1x1x32xf32> to vector<1x32xf32>
    %167 = vector.broadcast %166 : vector<1x32xf32> to vector<16x32xf32>
    %168 = arith.addf %164, %167 : vector<16x32xf32>
    %169 = arith.addf %168, %141 : vector<16x32xf32>
    %c0_75 = arith.constant 0 : index
    %c0_76 = arith.constant 0 : index
    %c0_77 = arith.constant 0 : index
    %170 = vector.load %arg16[%c0_75, %c0_76, %c0_77] : memref<2x1x32xf32, #tpu.memory_space<vmem>>, vector<1x1x32xf32>
    %171 = vector.shape_cast %170 : vector<1x1x32xf32> to vector<1x32xf32>
    %c0_78 = arith.constant 0 : index
    %c0_79 = arith.constant 0 : index
    %c0_80 = arith.constant 0 : index
    %172 = vector.load %arg17[%c0_78, %c0_79, %c0_80] : memref<2x1x32xf32, #tpu.memory_space<vmem>>, vector<1x1x32xf32>
    %173 = vector.shape_cast %172 : vector<1x1x32xf32> to vector<1x32xf32>
    %cst_81 = arith.constant dense<0.000000e+00> : vector<16xf32>
    %174 = vector.multi_reduction <add>, %169, %cst_81 [1] : vector<16x32xf32> to vector<16xf32>
    %175 = vector.shape_cast %174 : vector<16xf32> to vector<16x1xf32>
    %cst_82 = arith.constant 3.200000e+01 : f32
    %176 = vector.broadcast %cst_82 : f32 to vector<16x1xf32>
    %177 = arith.divf %175, %176 : vector<16x1xf32>
    %178 = vector.broadcast %177 : vector<16x1xf32> to vector<16x32xf32>
    %179 = arith.subf %169, %178 : vector<16x32xf32>
    %180 = arith.mulf %179, %179 : vector<16x32xf32>
    %cst_83 = arith.constant dense<0.000000e+00> : vector<16xf32>
    %181 = vector.multi_reduction <add>, %180, %cst_83 [1] : vector<16x32xf32> to vector<16xf32>
    %182 = vector.shape_cast %181 : vector<16xf32> to vector<16x1xf32>
    %cst_84 = arith.constant 3.200000e+01 : f32
    %183 = vector.broadcast %cst_84 : f32 to vector<16x1xf32>
    %184 = arith.divf %182, %183 : vector<16x1xf32>
    %185 = vector.broadcast %177 : vector<16x1xf32> to vector<16x32xf32>
    %186 = arith.subf %169, %185 : vector<16x32xf32>
    %cst_85 = arith.constant 9.99999996E-13 : f32
    %187 = vector.broadcast %cst_85 : f32 to vector<16x1xf32>
    %188 = arith.addf %184, %187 : vector<16x1xf32>
    %189 = math.rsqrt %188 : vector<16x1xf32>
    %190 = vector.broadcast %189 : vector<16x1xf32> to vector<16x32xf32>
    %191 = arith.mulf %186, %190 : vector<16x32xf32>
    %192 = vector.broadcast %171 : vector<1x32xf32> to vector<16x32xf32>
    %193 = arith.mulf %191, %192 : vector<16x32xf32>
    %194 = vector.broadcast %173 : vector<1x32xf32> to vector<16x32xf32>
    %195 = arith.addf %193, %194 : vector<16x32xf32>
    %c1 = arith.constant 1 : index
    %c0_86 = arith.constant 0 : index
    %c0_87 = arith.constant 0 : index
    %196 = vector.load %arg6[%c1, %c0_86, %c0_87] : memref<2x32x128xf32, #tpu.memory_space<vmem>>, vector<1x32x128xf32>
    %197 = vector.shape_cast %196 : vector<1x32x128xf32> to vector<32x128xf32>
    %cst_88 = arith.constant dense<0.000000e+00> : vector<16x128xf32>
    %198 = tpu.matmul %195, %197, %cst_88 {dimension_numbers = #tpu.dot_dimension_numbers<[1], [0], [0], [1], [0, 0, 1, 1], [], []>} : vector<16x32xf32>, vector<32x128xf32>, vector<16x128xf32> -> vector<16x128xf32>
    %c1_89 = arith.constant 1 : index
    %c0_90 = arith.constant 0 : index
    %c0_91 = arith.constant 0 : index
    %199 = vector.load %arg7[%c1_89, %c0_90, %c0_91] : memref<2x1x128xf32, #tpu.memory_space<vmem>>, vector<1x1x128xf32>
    %200 = vector.shape_cast %199 : vector<1x1x128xf32> to vector<1x128xf32>
    %201 = vector.broadcast %200 : vector<1x128xf32> to vector<16x128xf32>
    %202 = arith.addf %198, %201 : vector<16x128xf32>
    %203 = vector.extract_strided_slice %202 {offsets = [0, 0], sizes = [16, 16], strides = [1, 1]} : vector<16x128xf32> to vector<16x16xf32>
    %204 = vector.extract_strided_slice %202 {offsets = [0, 32], sizes = [16, 16], strides = [1, 1]} : vector<16x128xf32> to vector<16x16xf32>
    %205 = vector.extract_strided_slice %202 {offsets = [0, 64], sizes = [16, 16], strides = [1, 1]} : vector<16x128xf32> to vector<16x16xf32>
    %cst_92 = arith.constant dense<0.000000e+00> : vector<16x16xf32>
    %206 = tpu.matmul %203, %204, %cst_92 {dimension_numbers = #tpu.dot_dimension_numbers<[1], [1], [0], [0], [0, 0, 1, 0], [], []>} : vector<16x16xf32>, vector<16x16xf32>, vector<16x16xf32> -> vector<16x16xf32>
    %207 = arith.addf %206, %67 : vector<16x16xf32>
    %cst_93 = arith.constant dense<0xFF800000> : vector<16xf32>
    %208 = vector.multi_reduction <maximumf>, %207, %cst_93 [1] : vector<16x16xf32> to vector<16xf32>
    %209 = vector.shape_cast %208 : vector<16xf32> to vector<16x1xf32>
    %210 = vector.broadcast %209 : vector<16x1xf32> to vector<16x16xf32>
    %211 = arith.subf %207, %210 : vector<16x16xf32>
    %212 = math.exp %211 : vector<16x16xf32>
    %cst_94 = arith.constant dense<0.000000e+00> : vector<16xf32>
    %213 = vector.multi_reduction <add>, %212, %cst_94 [1] : vector<16x16xf32> to vector<16xf32>
    %214 = vector.shape_cast %213 : vector<16xf32> to vector<16x1xf32>
    %215 = tpu.reciprocal %214 {approx = true} : vector<16x1xf32> -> vector<16x1xf32>
    %216 = vector.broadcast %215 : vector<16x1xf32> to vector<16x16xf32>
    %217 = arith.mulf %212, %216 : vector<16x16xf32>
    %cst_95 = arith.constant dense<0.000000e+00> : vector<16x16xf32>
    %218 = tpu.matmul %217, %205, %cst_95 {dimension_numbers = #tpu.dot_dimension_numbers<[1], [0], [0], [1], [0, 0, 1, 1], [], []>} : vector<16x16xf32>, vector<16x16xf32>, vector<16x16xf32> -> vector<16x16xf32>
    %219 = vector.extract_strided_slice %202 {offsets = [0, 16], sizes = [16, 16], strides = [1, 1]} : vector<16x128xf32> to vector<16x16xf32>
    %220 = vector.extract_strided_slice %202 {offsets = [0, 48], sizes = [16, 16], strides = [1, 1]} : vector<16x128xf32> to vector<16x16xf32>
    %221 = vector.extract_strided_slice %202 {offsets = [0, 80], sizes = [16, 16], strides = [1, 1]} : vector<16x128xf32> to vector<16x16xf32>
    %cst_96 = arith.constant dense<0.000000e+00> : vector<16x16xf32>
    %222 = tpu.matmul %219, %220, %cst_96 {dimension_numbers = #tpu.dot_dimension_numbers<[1], [1], [0], [0], [0, 0, 1, 0], [], []>} : vector<16x16xf32>, vector<16x16xf32>, vector<16x16xf32> -> vector<16x16xf32>
    %223 = arith.addf %222, %67 : vector<16x16xf32>
    %cst_97 = arith.constant dense<0xFF800000> : vector<16xf32>
    %224 = vector.multi_reduction <maximumf>, %223, %cst_97 [1] : vector<16x16xf32> to vector<16xf32>
    %225 = vector.shape_cast %224 : vector<16xf32> to vector<16x1xf32>
    %226 = vector.broadcast %225 : vector<16x1xf32> to vector<16x16xf32>
    %227 = arith.subf %223, %226 : vector<16x16xf32>
    %228 = math.exp %227 : vector<16x16xf32>
    %cst_98 = arith.constant dense<0.000000e+00> : vector<16xf32>
    %229 = vector.multi_reduction <add>, %228, %cst_98 [1] : vector<16x16xf32> to vector<16xf32>
    %230 = vector.shape_cast %229 : vector<16xf32> to vector<16x1xf32>
    %231 = tpu.reciprocal %230 {approx = true} : vector<16x1xf32> -> vector<16x1xf32>
    %232 = vector.broadcast %231 : vector<16x1xf32> to vector<16x16xf32>
    %233 = arith.mulf %228, %232 : vector<16x16xf32>
    %cst_99 = arith.constant dense<0.000000e+00> : vector<16x16xf32>
    %234 = tpu.matmul %233, %221, %cst_99 {dimension_numbers = #tpu.dot_dimension_numbers<[1], [0], [0], [1], [0, 0, 1, 1], [], []>} : vector<16x16xf32>, vector<16x16xf32>, vector<16x16xf32> -> vector<16x16xf32>
    %235 = tpu.concatenate %218, %234 in 1 : vector<16x16xf32>, vector<16x16xf32> -> vector<16x32xf32>
    %c1_100 = arith.constant 1 : index
    %c0_101 = arith.constant 0 : index
    %c0_102 = arith.constant 0 : index
    %236 = vector.load %arg8[%c1_100, %c0_101, %c0_102] : memref<2x32x32xf32, #tpu.memory_space<vmem>>, vector<1x32x32xf32>
    %237 = vector.shape_cast %236 : vector<1x32x32xf32> to vector<32x32xf32>
    %cst_103 = arith.constant dense<0.000000e+00> : vector<16x32xf32>
    %238 = tpu.matmul %235, %237, %cst_103 {dimension_numbers = #tpu.dot_dimension_numbers<[1], [0], [0], [1], [0, 0, 1, 1], [], []>} : vector<16x32xf32>, vector<32x32xf32>, vector<16x32xf32> -> vector<16x32xf32>
    %c1_104 = arith.constant 1 : index
    %c0_105 = arith.constant 0 : index
    %c0_106 = arith.constant 0 : index
    %239 = vector.load %arg9[%c1_104, %c0_105, %c0_106] : memref<2x1x32xf32, #tpu.memory_space<vmem>>, vector<1x1x32xf32>
    %240 = vector.shape_cast %239 : vector<1x1x32xf32> to vector<1x32xf32>
    %241 = vector.broadcast %240 : vector<1x32xf32> to vector<16x32xf32>
    %242 = arith.addf %238, %241 : vector<16x32xf32>
    %243 = arith.addf %242, %195 : vector<16x32xf32>
    %c1_107 = arith.constant 1 : index
    %c0_108 = arith.constant 0 : index
    %c0_109 = arith.constant 0 : index
    %244 = vector.load %arg10[%c1_107, %c0_108, %c0_109] : memref<2x1x32xf32, #tpu.memory_space<vmem>>, vector<1x1x32xf32>
    %245 = vector.shape_cast %244 : vector<1x1x32xf32> to vector<1x32xf32>
    %c1_110 = arith.constant 1 : index
    %c0_111 = arith.constant 0 : index
    %c0_112 = arith.constant 0 : index
    %246 = vector.load %arg11[%c1_110, %c0_111, %c0_112] : memref<2x1x32xf32, #tpu.memory_space<vmem>>, vector<1x1x32xf32>
    %247 = vector.shape_cast %246 : vector<1x1x32xf32> to vector<1x32xf32>
    %cst_113 = arith.constant dense<0.000000e+00> : vector<16xf32>
    %248 = vector.multi_reduction <add>, %243, %cst_113 [1] : vector<16x32xf32> to vector<16xf32>
    %249 = vector.shape_cast %248 : vector<16xf32> to vector<16x1xf32>
    %cst_114 = arith.constant 3.200000e+01 : f32
    %250 = vector.broadcast %cst_114 : f32 to vector<16x1xf32>
    %251 = arith.divf %249, %250 : vector<16x1xf32>
    %252 = vector.broadcast %251 : vector<16x1xf32> to vector<16x32xf32>
    %253 = arith.subf %243, %252 : vector<16x32xf32>
    %254 = arith.mulf %253, %253 : vector<16x32xf32>
    %cst_115 = arith.constant dense<0.000000e+00> : vector<16xf32>
    %255 = vector.multi_reduction <add>, %254, %cst_115 [1] : vector<16x32xf32> to vector<16xf32>
    %256 = vector.shape_cast %255 : vector<16xf32> to vector<16x1xf32>
    %cst_116 = arith.constant 3.200000e+01 : f32
    %257 = vector.broadcast %cst_116 : f32 to vector<16x1xf32>
    %258 = arith.divf %256, %257 : vector<16x1xf32>
    %259 = vector.broadcast %251 : vector<16x1xf32> to vector<16x32xf32>
    %260 = arith.subf %243, %259 : vector<16x32xf32>
    %cst_117 = arith.constant 9.99999996E-13 : f32
    %261 = vector.broadcast %cst_117 : f32 to vector<16x1xf32>
    %262 = arith.addf %258, %261 : vector<16x1xf32>
    %263 = math.rsqrt %262 : vector<16x1xf32>
    %264 = vector.broadcast %263 : vector<16x1xf32> to vector<16x32xf32>
    %265 = arith.mulf %260, %264 : vector<16x32xf32>
    %266 = vector.broadcast %245 : vector<1x32xf32> to vector<16x32xf32>
    %267 = arith.mulf %265, %266 : vector<16x32xf32>
    %268 = vector.broadcast %247 : vector<1x32xf32> to vector<16x32xf32>
    %269 = arith.addf %267, %268 : vector<16x32xf32>
    %c1_118 = arith.constant 1 : index
    %c0_119 = arith.constant 0 : index
    %c0_120 = arith.constant 0 : index
    %270 = vector.load %arg12[%c1_118, %c0_119, %c0_120] : memref<2x32x64xf32, #tpu.memory_space<vmem>>, vector<1x32x64xf32>
    %271 = vector.shape_cast %270 : vector<1x32x64xf32> to vector<32x64xf32>
    %cst_121 = arith.constant dense<0.000000e+00> : vector<16x64xf32>
    %272 = tpu.matmul %269, %271, %cst_121 {dimension_numbers = #tpu.dot_dimension_numbers<[1], [0], [0], [1], [0, 0, 1, 1], [], []>} : vector<16x32xf32>, vector<32x64xf32>, vector<16x64xf32> -> vector<16x64xf32>
    %c1_122 = arith.constant 1 : index
    %c0_123 = arith.constant 0 : index
    %c0_124 = arith.constant 0 : index
    %273 = vector.load %arg13[%c1_122, %c0_123, %c0_124] : memref<2x1x64xf32, #tpu.memory_space<vmem>>, vector<1x1x64xf32>
    %274 = vector.shape_cast %273 : vector<1x1x64xf32> to vector<1x64xf32>
    %275 = vector.broadcast %274 : vector<1x64xf32> to vector<16x64xf32>
    %276 = arith.addf %272, %275 : vector<16x64xf32>
    %277 = arith.mulf %276, %276 : vector<16x64xf32>
    %278 = arith.mulf %276, %277 : vector<16x64xf32>
    %cst_125 = arith.constant 4.471500e-02 : f32
    %279 = vector.broadcast %cst_125 : f32 to vector<16x64xf32>
    %280 = arith.mulf %279, %278 : vector<16x64xf32>
    %281 = arith.addf %276, %280 : vector<16x64xf32>
    %cst_126 = arith.constant 0.797884583 : f32
    %282 = vector.broadcast %cst_126 : f32 to vector<16x64xf32>
    %283 = arith.mulf %282, %281 : vector<16x64xf32>
    %284 = math.tanh %283 : vector<16x64xf32>
    %cst_127 = arith.constant 1.000000e+00 : f32
    %285 = vector.broadcast %cst_127 : f32 to vector<16x64xf32>
    %286 = arith.addf %285, %284 : vector<16x64xf32>
    %cst_128 = arith.constant 5.000000e-01 : f32
    %287 = vector.broadcast %cst_128 : f32 to vector<16x64xf32>
    %288 = arith.mulf %287, %286 : vector<16x64xf32>
    %289 = arith.mulf %276, %288 : vector<16x64xf32>
    %c1_129 = arith.constant 1 : index
    %c0_130 = arith.constant 0 : index
    %c0_131 = arith.constant 0 : index
    %290 = vector.load %arg14[%c1_129, %c0_130, %c0_131] : memref<2x64x32xf32, #tpu.memory_space<vmem>>, vector<1x64x32xf32>
    %291 = vector.shape_cast %290 : vector<1x64x32xf32> to vector<64x32xf32>
    %cst_132 = arith.constant dense<0.000000e+00> : vector<16x32xf32>
    %292 = tpu.matmul %289, %291, %cst_132 {dimension_numbers = #tpu.dot_dimension_numbers<[1], [0], [0], [1], [0, 0, 1, 1], [], []>} : vector<16x64xf32>, vector<64x32xf32>, vector<16x32xf32> -> vector<16x32xf32>
    %c1_133 = arith.constant 1 : index
    %c0_134 = arith.constant 0 : index
    %c0_135 = arith.constant 0 : index
    %293 = vector.load %arg15[%c1_133, %c0_134, %c0_135] : memref<2x1x32xf32, #tpu.memory_space<vmem>>, vector<1x1x32xf32>
    %294 = vector.shape_cast %293 : vector<1x1x32xf32> to vector<1x32xf32>
    %295 = vector.broadcast %294 : vector<1x32xf32> to vector<16x32xf32>
    %296 = arith.addf %292, %295 : vector<16x32xf32>
    %297 = arith.addf %296, %269 : vector<16x32xf32>
    %c1_136 = arith.constant 1 : index
    %c0_137 = arith.constant 0 : index
    %c0_138 = arith.constant 0 : index
    %298 = vector.load %arg16[%c1_136, %c0_137, %c0_138] : memref<2x1x32xf32, #tpu.memory_space<vmem>>, vector<1x1x32xf32>
    %299 = vector.shape_cast %298 : vector<1x1x32xf32> to vector<1x32xf32>
    %c1_139 = arith.constant 1 : index
    %c0_140 = arith.constant 0 : index
    %c0_141 = arith.constant 0 : index
    %300 = vector.load %arg17[%c1_139, %c0_140, %c0_141] : memref<2x1x32xf32, #tpu.memory_space<vmem>>, vector<1x1x32xf32>
    %301 = vector.shape_cast %300 : vector<1x1x32xf32> to vector<1x32xf32>
    %cst_142 = arith.constant dense<0.000000e+00> : vector<16xf32>
    %302 = vector.multi_reduction <add>, %297, %cst_142 [1] : vector<16x32xf32> to vector<16xf32>
    %303 = vector.shape_cast %302 : vector<16xf32> to vector<16x1xf32>
    %cst_143 = arith.constant 3.200000e+01 : f32
    %304 = vector.broadcast %cst_143 : f32 to vector<16x1xf32>
    %305 = arith.divf %303, %304 : vector<16x1xf32>
    %306 = vector.broadcast %305 : vector<16x1xf32> to vector<16x32xf32>
    %307 = arith.subf %297, %306 : vector<16x32xf32>
    %308 = arith.mulf %307, %307 : vector<16x32xf32>
    %cst_144 = arith.constant dense<0.000000e+00> : vector<16xf32>
    %309 = vector.multi_reduction <add>, %308, %cst_144 [1] : vector<16x32xf32> to vector<16xf32>
    %310 = vector.shape_cast %309 : vector<16xf32> to vector<16x1xf32>
    %cst_145 = arith.constant 3.200000e+01 : f32
    %311 = vector.broadcast %cst_145 : f32 to vector<16x1xf32>
    %312 = arith.divf %310, %311 : vector<16x1xf32>
    %313 = vector.broadcast %305 : vector<16x1xf32> to vector<16x32xf32>
    %314 = arith.subf %297, %313 : vector<16x32xf32>
    %cst_146 = arith.constant 9.99999996E-13 : f32
    %315 = vector.broadcast %cst_146 : f32 to vector<16x1xf32>
    %316 = arith.addf %312, %315 : vector<16x1xf32>
    %317 = math.rsqrt %316 : vector<16x1xf32>
    %318 = vector.broadcast %317 : vector<16x1xf32> to vector<16x32xf32>
    %319 = arith.mulf %314, %318 : vector<16x32xf32>
    %320 = vector.broadcast %299 : vector<1x32xf32> to vector<16x32xf32>
    %321 = arith.mulf %319, %320 : vector<16x32xf32>
    %322 = vector.broadcast %301 : vector<1x32xf32> to vector<16x32xf32>
    %323 = arith.addf %321, %322 : vector<16x32xf32>
    %324 = vector.extract_strided_slice %323 {offsets = [0, 0], sizes = [1, 32], strides = [1, 1]} : vector<16x32xf32> to vector<1x32xf32>
    %325 = vector.extract_strided_slice %323 {offsets = [8, 0], sizes = [1, 32], strides = [1, 1]} : vector<16x32xf32> to vector<1x32xf32>
    %cst_147 = arith.constant 0.000000e+00 : f32
    %326 = vector.broadcast %cst_147 : f32 to vector<6x32xf32>
    %327 = tpu.concatenate %324, %325, %326 in 0 : vector<1x32xf32>, vector<1x32xf32>, vector<6x32xf32> -> vector<8x32xf32>
    %c0_148 = arith.constant 0 : index
    %c0_149 = arith.constant 0 : index
    %328 = vector.load %arg18[%c0_148, %c0_149] : memref<32x128xf32, #tpu.memory_space<vmem>>, vector<32x128xf32>
    %cst_150 = arith.constant dense<0.000000e+00> : vector<8x128xf32>
    %329 = tpu.matmul %327, %328, %cst_150 {dimension_numbers = #tpu.dot_dimension_numbers<[1], [0], [0], [1], [0, 0, 1, 1], [], []>} : vector<8x32xf32>, vector<32x128xf32>, vector<8x128xf32> -> vector<8x128xf32>
    %c0_151 = arith.constant 0 : index
    %c0_152 = arith.constant 0 : index
    %330 = vector.load %arg19[%c0_151, %c0_152] : memref<1x128xf32, #tpu.memory_space<vmem>>, vector<1x128xf32>
    %331 = vector.broadcast %330 : vector<1x128xf32> to vector<8x128xf32>
    %332 = arith.addf %329, %331 : vector<8x128xf32>
    %333 = arith.negf %332 : vector<8x128xf32>
    %334 = math.exp %333 : vector<8x128xf32>
    %cst_153 = arith.constant 1.000000e+00 : f32
    %335 = vector.broadcast %cst_153 : f32 to vector<8x128xf32>
    %336 = arith.addf %335, %334 : vector<8x128xf32>
    %337 = arith.divf %335, %336 : vector<8x128xf32>
    %c0_154 = arith.constant 0 : index
    %c0_155 = arith.constant 0 : index
    %338 = vector.load %arg20[%c0_154, %c0_155] : memref<8x128xf32, #tpu.memory_space<vmem>>, vector<8x128xf32>
    tpu.vector_store %arg20[%c0_154, %c0_155], %337 {strides = array<i32>} : memref<8x128xf32, #tpu.memory_space<vmem>>, vector<8x128xf32>,
    return
  }
}

</mosaic_0001>

<llo_original>
// kernel: emotion_classifier_forward.1
$region0: #{emotion_classifier_forward.1}
  #allocation0 [shape = 'u32[]', space=smem, size = 0x4, offset = 0x4, fixed_abs, tag = 'smem constant byte address 0x4 - core index']
  #allocation1 [shape = 'u32[144,128]{1,0:T(1,128)}', space=vmem, size = 0x12000, scoped, tag = 'internal scratch']
  %s0 = inlined_call_operand.vmem [shape: s32[16,1], index: 0, kind: input, shape index: {}]
  %s1 = inlined_call_operand.vmem [shape: s32[1,16], index: 1, kind: input, shape index: {}]
  %s2 = inlined_call_operand.vmem [shape: f32[128,32], index: 2, kind: input, shape index: {}]
  %s3 = inlined_call_operand.vmem [shape: f32[16,32], index: 3, kind: input, shape index: {}]
  %s4 = inlined_call_operand.vmem [shape: f32[1,32], index: 4, kind: input, shape index: {}]
  %s5 = inlined_call_operand.vmem [shape: f32[1,32], index: 5, kind: input, shape index: {}]
  %s6 = inlined_call_operand.vmem [shape: f32[2,32,128], index: 6, kind: input, shape index: {}]
  %s7 = inlined_call_operand.vmem [shape: f32[2,1,128], index: 7, kind: input, shape index: {}]
  %s8 = inlined_call_operand.vmem [shape: f32[2,32,32], index: 8, kind: input, shape index: {}]
  %s9 = inlined_call_operand.vmem [shape: f32[2,1,32], index: 9, kind: input, shape index: {}]
  %s10 = inlined_call_operand.vmem [shape: f32[2,1,32], index: 10, kind: input, shape index: {}]
  %s11 = inlined_call_operand.vmem [shape: f32[2,1,32], index: 11, kind: input, shape index: {}]
  %s12 = inlined_call_operand.vmem [shape: f32[2,32,64], index: 12, kind: input, shape index: {}]
  %s13 = inlined_call_operand.vmem [shape: f32[2,1,64], index: 13, kind: input, shape index: {}]
  %s14 = inlined_call_operand.vmem [shape: f32[2,64,32], index: 14, kind: input, shape index: {}]
  %s15 = inlined_call_operand.vmem [shape: f32[2,1,32], index: 15, kind: input, shape index: {}]
  %s16 = inlined_call_operand.vmem [shape: f32[2,1,32], index: 16, kind: input, shape index: {}]
  %s17 = inlined_call_operand.vmem [shape: f32[2,1,32], index: 17, kind: input, shape index: {}]
  %s18 = inlined_call_operand.vmem [shape: f32[32,128], index: 18, kind: input, shape index: {}]
  %s19 = inlined_call_operand.vmem [shape: f32[1,128], index: 19, kind: input, shape index: {}]
  %s20 = inlined_call_operand.vmem [shape: f32[8,128], index: 20, kind: output, shape index: {}]
  %s21 = sld [smem:[#allocation0]]
  $region90: #{emotion_classifier_forward.1} parent=0
    _
  %s23 = ssub.s32 1, %s21
  %s24 = scalar_select 0, %s23, %s21
  // Predicated region
  $region2: #{emotion_classifier_forward.1} parent=0 // pred_check
    _
  $region3: #{emotion_classifier_forward.1} parent=0 // pred_check_branch
    %26 = sbr.rel (0) target = $region5
  $region4: #{emotion_classifier_forward.1} parent=0 // pred_region
    _
  $region5: #{emotion_classifier_forward.1} parent=0 // pred_fallthru
    _
  // Predicated region
  $region6: #{emotion_classifier_forward.1} parent=0 // pred_check
    _
  $region7: #{emotion_classifier_forward.1} parent=0 // pred_check_branch
    %28 = sbr.rel (0) target = $region9
  $region8: #{emotion_classifier_forward.1} parent=0 // pred_region
    _
  $region9: #{emotion_classifier_forward.1} parent=0 // pred_fallthru
    _
  // Predicated region
  $region10: #{emotion_classifier_forward.1} parent=0 // pred_check
    _
  $region11: #{emotion_classifier_forward.1} parent=0 // pred_check_branch
    %30 = sbr.rel (0) target = $region13
  $region12: #{emotion_classifier_forward.1} parent=0 // pred_region
    _
  $region13: #{emotion_classifier_forward.1} parent=0 // pred_fallthru
    _
  // Predicated region
  $region14: #{emotion_classifier_forward.1} parent=0 // pred_check
    _
  $region15: #{emotion_classifier_forward.1} parent=0 // pred_check_branch
    %32 = sbr.rel (0) target = $region17
  $region16: #{emotion_classifier_forward.1} parent=0 // pred_region
    _
  $region17: #{emotion_classifier_forward.1} parent=0 // pred_fallthru
    _
  // Predicated region
  $region18: #{emotion_classifier_forward.1} parent=0 // pred_check
    _
  $region19: #{emotion_classifier_forward.1} parent=0 // pred_check_branch
    %34 = sbr.rel (0) target = $region21
  $region20: #{emotion_classifier_forward.1} parent=0 // pred_region
    _
  $region21: #{emotion_classifier_forward.1} parent=0 // pred_fallthru
    _
  // Predicated region
  $region22: #{emotion_classifier_forward.1} parent=0 // pred_check
    _
  $region23: #{emotion_classifier_forward.1} parent=0 // pred_check_branch
    %36 = sbr.rel (0) target = $region25
  $region24: #{emotion_classifier_forward.1} parent=0 // pred_region
    _
  $region25: #{emotion_classifier_forward.1} parent=0 // pred_fallthru
    _
  // Predicated region
  $region26: #{emotion_classifier_forward.1} parent=0 // pred_check
    _
  $region27: #{emotion_classifier_forward.1} parent=0 // pred_check_branch
    %38 = sbr.rel (0) target = $region29
  $region28: #{emotion_classifier_forward.1} parent=0 // pred_region
    _
  $region29: #{emotion_classifier_forward.1} parent=0 // pred_fallthru
    _
  // Predicated region
  $region30: #{emotion_classifier_forward.1} parent=0 // pred_check
    _
  $region31: #{emotion_classifier_forward.1} parent=0 // pred_check_branch
    %40 = sbr.rel (0) target = $region33
  $region32: #{emotion_classifier_forward.1} parent=0 // pred_region
    _
  $region33: #{emotion_classifier_forward.1} parent=0 // pred_fallthru
    _
  // Predicated region
  $region34: #{emotion_classifier_forward.1} parent=0 // pred_check
    _
  $region35: #{emotion_classifier_forward.1} parent=0 // pred_check_branch
    %42 = sbr.rel (0) target = $region37
  $region36: #{emotion_classifier_forward.1} parent=0 // pred_region
    _
  $region37: #{emotion_classifier_forward.1} parent=0 // pred_fallthru
    _
  // Predicated region
  $region38: #{emotion_classifier_forward.1} parent=0 // pred_check
    _
  $region39: #{emotion_classifier_forward.1} parent=0 // pred_check_branch
    %44 = sbr.rel (0) target = $region41
  $region40: #{emotion_classifier_forward.1} parent=0 // pred_region
    _
  $region41: #{emotion_classifier_forward.1} parent=0 // pred_fallthru
    _
  // Predicated region
  $region42: #{emotion_classifier_forward.1} parent=0 // pred_check
    _
  $region43: #{emotion_classifier_forward.1} parent=0 // pred_check_branch
    %46 = sbr.rel (0) target = $region45
  $region44: #{emotion_classifier_forward.1} parent=0 // pred_region
    _
  $region45: #{emotion_classifier_forward.1} parent=0 // pred_fallthru
    _
  // Predicated region
  $region46: #{emotion_classifier_forward.1} parent=0 // pred_check
    _
  $region47: #{emotion_classifier_forward.1} parent=0 // pred_check_branch
    %48 = sbr.rel (0) target = $region49
  $region48: #{emotion_classifier_forward.1} parent=0 // pred_region
    _
  $region49: #{emotion_classifier_forward.1} parent=0 // pred_fallthru
    _
  // Predicated region
  $region50: #{emotion_classifier_forward.1} parent=0 // pred_check
    _
  $region51: #{emotion_classifier_forward.1} parent=0 // pred_check_branch
    %50 = sbr.rel (0) target = $region53
  $region52: #{emotion_classifier_forward.1} parent=0 // pred_region
    _
  $region53: #{emotion_classifier_forward.1} parent=0 // pred_fallthru
    _
  // Predicated region
  $region54: #{emotion_classifier_forward.1} parent=0 // pred_check
    _
  $region55: #{emotion_classifier_forward.1} parent=0 // pred_check_branch
    %52 = sbr.rel (0) target = $region57
  $region56: #{emotion_classifier_forward.1} parent=0 // pred_region
    _
  $region57: #{emotion_classifier_forward.1} parent=0 // pred_fallthru
    _
  // Predicated region
  $region58: #{emotion_classifier_forward.1} parent=0 // pred_check
    _
  $region59: #{emotion_classifier_forward.1} parent=0 // pred_check_branch
    %54 = sbr.rel (0) target = $region61
  $region60: #{emotion_classifier_forward.1} parent=0 // pred_region
    _
  $region61: #{emotion_classifier_forward.1} parent=0 // pred_fallthru
    _
  // Predicated region
  $region62: #{emotion_classifier_forward.1} parent=0 // pred_check
    _
  $region63: #{emotion_classifier_forward.1} parent=0 // pred_check_branch
    %56 = sbr.rel (0) target = $region65
  $region64: #{emotion_classifier_forward.1} parent=0 // pred_region
    _
  $region65: #{emotion_classifier_forward.1} parent=0 // pred_fallthru
    _
  // Predicated region
  $region66: #{emotion_classifier_forward.1} parent=0 // pred_check
    _
  $region67: #{emotion_classifier_forward.1} parent=0 // pred_check_branch
    %58 = sbr.rel (0) target = $region69
  $region68: #{emotion_classifier_forward.1} parent=0 // pred_region
    _
  $region69: #{emotion_classifier_forward.1} parent=0 // pred_fallthru
    _
  // Predicated region
  $region70: #{emotion_classifier_forward.1} parent=0 // pred_check
    _
  $region71: #{emotion_classifier_forward.1} parent=0 // pred_check_branch
    %60 = sbr.rel (0) target = $region73
  $region72: #{emotion_classifier_forward.1} parent=0 // pred_region
    _
  $region73: #{emotion_classifier_forward.1} parent=0 // pred_fallthru
    _
  // Predicated region
  $region74: #{emotion_classifier_forward.1} parent=0 // pred_check
    _
  $region75: #{emotion_classifier_forward.1} parent=0 // pred_check_branch
    %62 = sbr.rel (0) target = $region77
  $region76: #{emotion_classifier_forward.1} parent=0 // pred_region
    _
  $region77: #{emotion_classifier_forward.1} parent=0 // pred_fallthru
    _
  // Predicated region
  $region78: #{emotion_classifier_forward.1} parent=0 // pred_check
    _
  $region79: #{emotion_classifier_forward.1} parent=0 // pred_check_branch
    %64 = sbr.rel (0) target = $region81
  $region80: #{emotion_classifier_forward.1} parent=0 // pred_region
    _
  $region81: #{emotion_classifier_forward.1} parent=0 // pred_fallthru
    _
  %v65 = vld [vmem:[%s0] sm:$0xff]
  %v66 = vld [vmem:[%s0 + $0x8] sm:$0xff]
  %v67 = vlaneseq
  %v68 = vand.u32 %v67, 127
  %69 = vset.pattern.permute.xlu0 0
  %70 = vperm.xlu0 %69, %v65
  %v71 = vpop.permute.xlu0 %70
  %72 = vset.pattern.permute.xlu0 0
  %73 = vperm.xlu0 %72, %v66
  %v74 = vpop.permute.xlu0 %73
  %vm75 = vcmp.eq.s32.totalorder %v68, %v71
  %vm76 = vcmp.eq.s32.totalorder %v68, %v74
  %v77 = vsel %vm75, 1, 0
  %v78 = vsel %vm76, 1, 0
  %v79 = vcvt.s32.f32 %v77
  %v80 = vcvt.s32.f32 %v78
  %v81 = vld [vmem:[%s2] sm:$0xff]
  %v82 = vld [vmem:[%s2 + $0x8] sm:$0xff]
  %v83 = vld [vmem:[%s2 + $0x10] sm:$0xff]
  %v84 = vld [vmem:[%s2 + $0x18] sm:$0xff]
  %v85 = vld [vmem:[%s2 + $0x20] sm:$0xff]
  %v86 = vld [vmem:[%s2 + $0x28] sm:$0xff]
  %v87 = vld [vmem:[%s2 + $0x30] sm:$0xff]
  %v88 = vld [vmem:[%s2 + $0x38] sm:$0xff]
  %v89 = vld [vmem:[%s2 + $0x40] sm:$0xff]
  %v90 = vld [vmem:[%s2 + $0x48] sm:$0xff]
  %v91 = vld [vmem:[%s2 + $0x50] sm:$0xff]
  %v92 = vld [vmem:[%s2 + $0x58] sm:$0xff]
  %v93 = vld [vmem:[%s2 + $0x60] sm:$0xff]
  %v94 = vld [vmem:[%s2 + $0x68] sm:$0xff]
  %v95 = vld [vmem:[%s2 + $0x70] sm:$0xff]
  %v96 = vld [vmem:[%s2 + $0x78] sm:$0xff]
  %v97 = vld [vmem:[%s3] sm:$0xff]
  %98 = vmatprep.subr.mxu0 0.0
  %99 = vmatpush1.msra.mxu0 %v96
  %100 = vmatprep.subr.mxu0 0.0
  %101 = vmatpush1.msra.mxu0 %v95
  %102 = vmatprep.subr.mxu0 0.0
  %103 = vmatpush1.msra.mxu0 %v94
  %104 = vmatprep.subr.mxu0 0.0
  %105 = vmatpush1.msra.mxu0 %v93
  %106 = vmatprep.subr.mxu0 0.0
  %107 = vmatpush1.msra.mxu0 %v92
  %108 = vmatprep.subr.mxu0 0.0
  %109 = vmatpush1.msra.mxu0 %v91
  %110 = vmatprep.subr.mxu0 0.0
  %111 = vmatpush1.msra.mxu0 %v90
  %112 = vmatprep.subr.mxu0 0.0
  %113 = vmatpush1.msra.mxu0 %v89
  %114 = vmatprep.subr.mxu0 0.0
  %115 = vmatpush1.msra.mxu0 %v88
  %116 = vmatprep.subr.mxu0 0.0
  %117 = vmatpush1.msra.mxu0 %v87
  %118 = vmatprep.subr.mxu0 0.0
  %119 = vmatpush1.msra.mxu0 %v86
  %120 = vmatprep.subr.mxu0 0.0
  %121 = vmatpush1.msra.mxu0 %v85
  %122 = vmatprep.subr.mxu0 0.0
  %123 = vmatpush1.msra.mxu0 %v84
  %124 = vmatprep.subr.mxu0 0.0
  %125 = vmatpush1.msra.mxu0 %v83
  %126 = vmatprep.subr.mxu0 0.0
  %127 = vmatpush1.msra.mxu0 %v82
  %128 = vmatprep.subr.mxu0 0.0
  %129 = vmatpush1.msra.mxu0 %v81
  %130 = vmatprep.subr.mxu0 0.0
  %131 = vmatpush2.msra.mxu0 0.0
  %132 = vmatprep.subr.mxu0 0.0
  %133 = vmatpush2.msra.mxu0 0.0
  %134 = vmatprep.subr.mxu0 0.0
  %135 = vmatpush2.msra.mxu0 0.0
  %136 = vmatprep.subr.mxu0 0.0
  %137 = vmatpush2.msra.mxu0 0.0
  %138 = vmatprep.subr.mxu0 0.0
  %139 = vmatpush2.msra.mxu0 0.0
  %140 = vmatprep.subr.mxu0 0.0
  %141 = vmatpush2.msra.mxu0 0.0
  %142 = vmatprep.subr.mxu0 0.0
  %143 = vmatpush2.msra.mxu0 0.0
  %144 = vmatprep.subr.mxu0 0.0
  %145 = vmatpush2.msra.mxu0 0.0
  %146 = vmatprep.subr.mxu0 0.0
  %147 = vmatpush2.msra.mxu0 0.0
  %148 = vmatprep.subr.mxu0 0.0
  %149 = vmatpush2.msra.mxu0 0.0
  %150 = vmatprep.subr.mxu0 0.0
  %151 = vmatpush2.msra.mxu0 0.0
  %152 = vmatprep.subr.mxu0 0.0
  %153 = vmatpush2.msra.mxu0 0.0
  %154 = vmatprep.subr.mxu0 0.0
  %155 = vmatpush2.msra.mxu0 0.0
  %156 = vmatprep.subr.mxu0 0.0
  %157 = vmatpush2.msra.mxu0 0.0
  %158 = vmatprep.subr.mxu0 0.0
  %159 = vmatpush2.msra.mxu0 0.0
  %160 = vmatprep.subr.mxu0 0.0
  %161 = vmatpush2.msra.mxu0 0.0
  %162 = vmatprep.mubr.f32.mxu0 0.0
  %163 = vmatmul.mubr.f32.gmra.mxu0 %v79
  %v164 = vpop.f32.mrf.mxu0
  %v165 = vadd.f32 %v97, %v164
  %v166 = vpop.f32.mrf.mxu0
  %167 = vmatprep.mubr.f32.mxu0 0.0
  %168 = vmatmul.mubr.f32.gmra.mxu0 %v80
  %v169 = vpop.f32.mrf.mxu0
  %v170 = vadd.f32 %v97, %v169
  %v171 = vpop.f32.mrf.mxu0
  %172 = vdwg.mxu0
  %v173 = vld [vmem:[%s4] sm:$0x1]
  %v174 = vld [vmem:[%s5] sm:$0x1]
  %vm175 = vcmask 261120
  %v176 = vsel %vm175, %v165, 0.0
  %177 = vadd.xlane.f32.xlu0 %v176
  %v178 = vpop.xlane.xlu0 %177
  %v179 = vsel %vm175, %v170, 0.0
  %180 = vadd.xlane.f32.xlu0 %v179
  %v181 = vpop.xlane.xlu0 %180
  %v182 = vrcp.pop 32.0
  %v183 = vmul.f32 %v178, %v182
  %v184 = vmul.f32 %v181, %v182
  %v185 = vsub.f32 %v165, %v183
  %v186 = vsub.f32 %v170, %v184
  %v187 = vmul.f32 %v185, %v185
  %v188 = vmul.f32 %v186, %v186
  %v189 = vsel %vm175, %v187, 0.0
  %190 = vadd.xlane.f32.xlu0 %v189
  %v191 = vpop.xlane.xlu0 %190
  %v192 = vsel %vm175, %v188, 0.0
  %193 = vadd.xlane.f32.xlu0 %v192
  %v194 = vpop.xlane.xlu0 %193
  %v195 = vmul.f32 %v191, %v182
  %v196 = vmul.f32 %v194, %v182
  %v197 = vadd.f32 %v195, 1e-12
  %v198 = vadd.f32 %v196, 1e-12
  %v199 = vrsqrt.pop %v197
  %v200 = vrsqrt.pop %v198
  %v201 = vmul.f32 %v185, %v199
  %v202 = vmul.f32 %v186, %v200
  %v204 = vlaneseq
  %v205 = vshrl.u32 %v204, 7
  %v206 = vsub.s32 0, %v205
  %v207 = vrot.slane %v173, %v206
  %v209 = vmul.f32 %v201, %v207
  %v210 = vmul.f32 %v202, %v207
  %v212 = vlaneseq
  %v213 = vshrl.u32 %v212, 7
  %v214 = vsub.s32 0, %v213
  %v215 = vrot.slane %v174, %v214
  %v217 = vadd.f32 %v209, %v215
  %v218 = vadd.f32 %v210, %v215
  %v219 = vlaneseq
  %v220 = vshrl.u32 %v219, 7
  %v221 = vadd.s32 %v220, 8
  %vm222 = vcmp.ge.s32.totalorder %v220, 0
  %vm223 = vcmp.ge.s32.totalorder %v221, 0
  %vm224 = vcmp.lt.s32.totalorder %v220, 8
  %vm225 = vcmp.lt.s32.totalorder %v221, 8
  %vm226 = vmand %vm222, %vm224
  %vm227 = vmand %vm223, %vm225
  %vm228 = vcmp.ge.s32.totalorder %v68, 0
  %vm229 = vmand %vm226, %vm228
  %vm230 = vmand %vm227, %vm228
  %vm231 = vcmp.lt.s32.totalorder %v68, 8
  %vm232 = vmand %vm229, %vm231
  %vm233 = vmand %vm230, %vm231
  %vm234 = vcmp.ge.s32.totalorder %v220, 8
  %vm235 = vcmp.ge.s32.totalorder %v221, 8
  %vm236 = vcmp.lt.s32.totalorder %v220, 16
  %vm237 = vcmp.lt.s32.totalorder %v221, 16
  %vm238 = vmand %vm234, %vm236
  %vm239 = vmand %vm235, %vm237
  %vm240 = vcmp.ge.s32.totalorder %v68, 8
  %vm241 = vmand %vm238, %vm240
  %vm242 = vmand %vm239, %vm240
  %vm243 = vcmp.lt.s32.totalorder %v68, 16
  %vm244 = vmand %vm241, %vm243
  %vm245 = vmand %vm242, %vm243
  %vm246 = vmor %vm232, %vm244
  %vm247 = vmor %vm233, %vm245
  %v248 = vld [vmem:[%s1] sm:$0x1]
  %vm249 = vcmp.gt.s32.totalorder %v248, 0
  %v250 = vsel %vm249, 1, 0
  %v251 = vlaneseq
  %v252 = vshrl.u32 %v251, 7
  %v253 = vsub.s32 0, %v252
  %v254 = vrot.slane %v250, %v253
  %vm255 = vcmp.eq.s32.totalorder %v254, 1
  %vm256 = vmand %vm246, %vm255
  %vm257 = vmand %vm247, %vm255
  %v258 = vsel %vm256, 0.0, -1e+09
  %v259 = vsel %vm257, 0.0, -1e+09
  %v260 = vld [vmem:[%s6] sm:$0xff]
  %v261 = vld [vmem:[%s6 + $0x8] sm:$0xff]
  %v262 = vld [vmem:[%s6 + $0x10] sm:$0xff]
  %v263 = vld [vmem:[%s6 + $0x18] sm:$0xff]
  %v264 = vld [vmem:[%s7] sm:$0x1]
  %v266 = vlaneseq
  %v267 = vshrl.u32 %v266, 7
  %v268 = vsub.s32 0, %v267
  %v269 = vrot.slane %v264, %v268
  %v272 = vsel %vm175, %v217, 0
  %v275 = vsel %vm175, %v218, 0
  %277 = vmatprep.subr.mxu0 0.0
  %278 = vmatpush1.msra.mxu0 0.0
  %279 = vmatprep.subr.mxu0 0.0
  %280 = vmatpush1.msra.mxu0 0.0
  %281 = vmatprep.subr.mxu0 0.0
  %282 = vmatpush1.msra.mxu0 0.0
  %283 = vmatprep.subr.mxu0 0.0
  %284 = vmatpush1.msra.mxu0 0.0
  %285 = vmatprep.subr.mxu0 0.0
  %286 = vmatpush1.msra.mxu0 0.0
  %287 = vmatprep.subr.mxu0 0.0
  %288 = vmatpush1.msra.mxu0 0.0
  %289 = vmatprep.subr.mxu0 0.0
  %290 = vmatpush1.msra.mxu0 0.0
  %291 = vmatprep.subr.mxu0 0.0
  %292 = vmatpush1.msra.mxu0 0.0
  %293 = vmatprep.subr.mxu0 0.0
  %294 = vmatpush1.msra.mxu0 0.0
  %295 = vmatprep.subr.mxu0 0.0
  %296 = vmatpush1.msra.mxu0 0.0
  %297 = vmatprep.subr.mxu0 0.0
  %298 = vmatpush1.msra.mxu0 0.0
  %299 = vmatprep.subr.mxu0 0.0
  %300 = vmatpush1.msra.mxu0 0.0
  %301 = vmatprep.subr.mxu0 0.0
  %302 = vmatpush1.msra.mxu0 %v263
  %303 = vmatprep.subr.mxu0 0.0
  %304 = vmatpush1.msra.mxu0 %v262
  %305 = vmatprep.subr.mxu0 0.0
  %306 = vmatpush1.msra.mxu0 %v261
  %307 = vmatprep.subr.mxu0 0.0
  %308 = vmatpush1.msra.mxu0 %v260
  %309 = vmatprep.subr.mxu0 0.0
  %310 = vmatpush2.msra.mxu0 0.0
  %311 = vmatprep.subr.mxu0 0.0
  %312 = vmatpush2.msra.mxu0 0.0
  %313 = vmatprep.subr.mxu0 0.0
  %314 = vmatpush2.msra.mxu0 0.0
  %315 = vmatprep.subr.mxu0 0.0
  %316 = vmatpush2.msra.mxu0 0.0
  %317 = vmatprep.subr.mxu0 0.0
  %318 = vmatpush2.msra.mxu0 0.0
  %319 = vmatprep.subr.mxu0 0.0
  %320 = vmatpush2.msra.mxu0 0.0
  %321 = vmatprep.subr.mxu0 0.0
  %322 = vmatpush2.msra.mxu0 0.0
  %323 = vmatprep.subr.mxu0 0.0
  %324 = vmatpush2.msra.mxu0 0.0
  %325 = vmatprep.subr.mxu0 0.0
  %326 = vmatpush2.msra.mxu0 0.0
  %327 = vmatprep.subr.mxu0 0.0
  %328 = vmatpush2.msra.mxu0 0.0
  %329 = vmatprep.subr.mxu0 0.0
  %330 = vmatpush2.msra.mxu0 0.0
  %331 = vmatprep.subr.mxu0 0.0
  %332 = vmatpush2.msra.mxu0 0.0
  %333 = vmatprep.subr.mxu0 0.0
  %334 = vmatpush2.msra.mxu0 0.0
  %335 = vmatprep.subr.mxu0 0.0
  %336 = vmatpush2.msra.mxu0 0.0
  %337 = vmatprep.subr.mxu0 0.0
  %338 = vmatpush2.msra.mxu0 0.0
  %339 = vmatprep.subr.mxu0 0.0
  %340 = vmatpush2.msra.mxu0 0.0
  %341 = vmatprep.mubr.f32.mxu0 0.0
  %342 = vmatmul.mubr.f32.gmra.mxu0 %v272
  %v343 = vpop.f32.mrf.mxu0
  %v344 = vadd.f32 %v269, %v343
  %v345 = vpop.f32.mrf.mxu0
  %346 = vmatprep.mubr.f32.mxu0 0.0
  %347 = vmatmul.mubr.f32.gmra.mxu0 %v275
  %v348 = vpop.f32.mrf.mxu0
  %v349 = vadd.f32 %v269, %v348
  %v350 = vpop.f32.mrf.mxu0
  %351 = vdwg.mxu0
  %354 = vrot.lane.b32.xlu0 %v344, 96
  %v355 = vpop.permute.xlu0 %354
  %356 = vrot.lane.b32.xlu0 %v349, 96
  %v357 = vpop.permute.xlu0 %356
  %vm358 = vcmask 130048
  %v359 = vsel %vm358, %v344, 0
  %v361 = vsel %vm358, %v349, 0
  %v363 = vsel %vm358, %v355, 0
  %v365 = vsel %vm358, %v357, 0
  %367 = vmatprep.subr.mxu0 0.0
  %368 = vmatpush1.xpose.msra.mxu0 0.0
  %369 = vmatprep.subr.mxu0 0.0
  %370 = vmatpush1.xpose.msra.mxu0 0.0
  %371 = vmatprep.subr.mxu0 0.0
  %372 = vmatpush1.xpose.msra.mxu0 0.0
  %373 = vmatprep.subr.mxu0 0.0
  %374 = vmatpush1.xpose.msra.mxu0 0.0
  %375 = vmatprep.subr.mxu0 0.0
  %376 = vmatpush1.xpose.msra.mxu0 0.0
  %377 = vmatprep.subr.mxu0 0.0
  %378 = vmatpush1.xpose.msra.mxu0 0.0
  %379 = vmatprep.subr.mxu0 0.0
  %380 = vmatpush1.xpose.msra.mxu0 0.0
  %381 = vmatprep.subr.mxu0 0.0
  %382 = vmatpush1.xpose.msra.mxu0 0.0
  %383 = vmatprep.subr.mxu0 0.0
  %384 = vmatpush1.xpose.msra.mxu0 0.0
  %385 = vmatprep.subr.mxu0 0.0
  %386 = vmatpush1.xpose.msra.mxu0 0.0
  %387 = vmatprep.subr.mxu0 0.0
  %388 = vmatpush1.xpose.msra.mxu0 0.0
  %389 = vmatprep.subr.mxu0 0.0
  %390 = vmatpush1.xpose.msra.mxu0 0.0
  %391 = vmatprep.subr.mxu0 0.0
  %392 = vmatpush1.xpose.msra.mxu0 0.0
  %393 = vmatprep.subr.mxu0 0.0
  %394 = vmatpush1.xpose.msra.mxu0 0.0
  %395 = vmatprep.subr.mxu0 0.0
  %396 = vmatpush1.xpose.msra.mxu0 %v365
  %397 = vmatprep.subr.mxu0 0.0
  %398 = vmatpush1.xpose.msra.mxu0 %v363
  %399 = vmatprep.subr.mxu0 0.0
  %400 = vmatpush2.xpose.msra.mxu0 0.0
  %401 = vmatprep.subr.mxu0 0.0
  %402 = vmatpush2.xpose.msra.mxu0 0.0
  %403 = vmatprep.subr.mxu0 0.0
  %404 = vmatpush2.xpose.msra.mxu0 0.0
  %405 = vmatprep.subr.mxu0 0.0
  %406 = vmatpush2.xpose.msra.mxu0 0.0
  %407 = vmatprep.subr.mxu0 0.0
  %408 = vmatpush2.xpose.msra.mxu0 0.0
  %409 = vmatprep.subr.mxu0 0.0
  %410 = vmatpush2.xpose.msra.mxu0 0.0
  %411 = vmatprep.subr.mxu0 0.0
  %412 = vmatpush2.xpose.msra.mxu0 0.0
  %413 = vmatprep.subr.mxu0 0.0
  %414 = vmatpush2.xpose.msra.mxu0 0.0
  %415 = vmatprep.subr.mxu0 0.0
  %416 = vmatpush2.xpose.msra.mxu0 0.0
  %417 = vmatprep.subr.mxu0 0.0
  %418 = vmatpush2.xpose.msra.mxu0 0.0
  %419 = vmatprep.subr.mxu0 0.0
  %420 = vmatpush2.xpose.msra.mxu0 0.0
  %421 = vmatprep.subr.mxu0 0.0
  %422 = vmatpush2.xpose.msra.mxu0 0.0
  %423 = vmatprep.subr.mxu0 0.0
  %424 = vmatpush2.xpose.msra.mxu0 0.0
  %425 = vmatprep.subr.mxu0 0.0
  %426 = vmatpush2.xpose.msra.mxu0 0.0
  %427 = vmatprep.subr.mxu0 0.0
  %428 = vmatpush2.xpose.msra.mxu0 0.0
  %429 = vmatprep.subr.mxu0 0.0
  %430 = vmatpush2.xpose.msra.mxu0 0.0
  %431 = vmatprep.mubr.f32.mxu0 0.0
  %432 = vmatmul.mubr.f32.gmra.mxu0 %v359
  %v433 = vpop.f32.mrf.mxu0
  %v434 = vadd.f32 %v258, %v433
  %v435 = vpop.f32.mrf.mxu0
  %436 = vmatprep.mubr.f32.mxu0 0.0
  %437 = vmatmul.mubr.f32.gmra.mxu0 %v361
  %v438 = vpop.f32.mrf.mxu0
  %v439 = vadd.f32 %v259, %v438
  %v440 = vpop.f32.mrf.mxu0
  %441 = vdwg.mxu0
  %v442 = vsel %vm358, %v434, -inf
  %443 = vmax.xlane.f32.xlu0 %v442
  %v444 = vpop.xlane.xlu0 %443
  %v445 = vsel %vm358, %v439, -inf
  %446 = vmax.xlane.f32.xlu0 %v445
  %v447 = vpop.xlane.xlu0 %446
  %v448 = vsub.f32 %v434, %v444
  %v449 = vsub.f32 %v439, %v447
  %v450 = vmul.f32 %v448, 1.442695
  %v451 = vpow.pop %v450
  %v452 = vmul.f32 %v449, 1.442695
  %v453 = vpow.pop %v452
  %v454 = vsel %vm358, %v451, 0.0
  %455 = vadd.xlane.f32.xlu0 %v454
  %v456 = vpop.xlane.xlu0 %455
  %v457 = vsel %vm358, %v453, 0.0
  %458 = vadd.xlane.f32.xlu0 %v457
  %v459 = vpop.xlane.xlu0 %458
  %v460 = vrcp.pop %v456
  %v461 = vrcp.pop %v459
  %v462 = vmul.f32 %v451, %v460
  %v463 = vmul.f32 %v453, %v461
  %464 = vrot.lane.b32.xlu0 %v344, 64
  %v465 = vpop.permute.xlu0 %464
  %466 = vrot.lane.b32.xlu0 %v349, 64
  %v467 = vpop.permute.xlu0 %466
  %v471 = vsel %vm358, %v462, 0
  %v474 = vsel %vm358, %v463, 0
  %476 = vmatprep.subr.mxu0 0.0
  %477 = vmatpush1.msra.mxu0 0.0
  %478 = vmatprep.subr.mxu0 0.0
  %479 = vmatpush1.msra.mxu0 0.0
  %480 = vmatprep.subr.mxu0 0.0
  %481 = vmatpush1.msra.mxu0 0.0
  %482 = vmatprep.subr.mxu0 0.0
  %483 = vmatpush1.msra.mxu0 0.0
  %484 = vmatprep.subr.mxu0 0.0
  %485 = vmatpush1.msra.mxu0 0.0
  %486 = vmatprep.subr.mxu0 0.0
  %487 = vmatpush1.msra.mxu0 0.0
  %488 = vmatprep.subr.mxu0 0.0
  %489 = vmatpush1.msra.mxu0 0.0
  %490 = vmatprep.subr.mxu0 0.0
  %491 = vmatpush1.msra.mxu0 0.0
  %492 = vmatprep.subr.mxu0 0.0
  %493 = vmatpush1.msra.mxu0 0.0
  %494 = vmatprep.subr.mxu0 0.0
  %495 = vmatpush1.msra.mxu0 0.0
  %496 = vmatprep.subr.mxu0 0.0
  %497 = vmatpush1.msra.mxu0 0.0
  %498 = vmatprep.subr.mxu0 0.0
  %499 = vmatpush1.msra.mxu0 0.0
  %500 = vmatprep.subr.mxu0 0.0
  %501 = vmatpush1.msra.mxu0 0.0
  %502 = vmatprep.subr.mxu0 0.0
  %503 = vmatpush1.msra.mxu0 0.0
  %504 = vmatprep.subr.mxu0 0.0
  %505 = vmatpush1.msra.mxu0 %v467
  %506 = vmatprep.subr.mxu0 0.0
  %507 = vmatpush1.msra.mxu0 %v465
  %508 = vmatprep.subr.mxu0 0.0
  %509 = vmatpush2.msra.mxu0 0.0
  %510 = vmatprep.subr.mxu0 0.0
  %511 = vmatpush2.msra.mxu0 0.0
  %512 = vmatprep.subr.mxu0 0.0
  %513 = vmatpush2.msra.mxu0 0.0
  %514 = vmatprep.subr.mxu0 0.0
  %515 = vmatpush2.msra.mxu0 0.0
  %516 = vmatprep.subr.mxu0 0.0
  %517 = vmatpush2.msra.mxu0 0.0
  %518 = vmatprep.subr.mxu0 0.0
  %519 = vmatpush2.msra.mxu0 0.0
  %520 = vmatprep.subr.mxu0 0.0
  %521 = vmatpush2.msra.mxu0 0.0
  %522 = vmatprep.subr.mxu0 0.0
  %523 = vmatpush2.msra.mxu0 0.0
  %524 = vmatprep.subr.mxu0 0.0
  %525 = vmatpush2.msra.mxu0 0.0
  %526 = vmatprep.subr.mxu0 0.0
  %527 = vmatpush2.msra.mxu0 0.0
  %528 = vmatprep.subr.mxu0 0.0
  %529 = vmatpush2.msra.mxu0 0.0
  %530 = vmatprep.subr.mxu0 0.0
  %531 = vmatpush2.msra.mxu0 0.0
  %532 = vmatprep.subr.mxu0 0.0
  %533 = vmatpush2.msra.mxu0 0.0
  %534 = vmatprep.subr.mxu0 0.0
  %535 = vmatpush2.msra.mxu0 0.0
  %536 = vmatprep.subr.mxu0 0.0
  %537 = vmatpush2.msra.mxu0 0.0
  %538 = vmatprep.subr.mxu0 0.0
  %539 = vmatpush2.msra.mxu0 0.0
  %540 = vmatprep.mubr.f32.mxu0 0.0
  %541 = vmatmul.mubr.f32.gmra.mxu0 %v471
  %v542 = vpop.f32.mrf.mxu0
  %v543 = vadd.f32 0.0, %v542
  %v544 = vpop.f32.mrf.mxu0
  %545 = vmatprep.mubr.f32.mxu0 0.0
  %546 = vmatmul.mubr.f32.gmra.mxu0 %v474
  %v547 = vpop.f32.mrf.mxu0
  %v548 = vadd.f32 0.0, %v547
  %v549 = vpop.f32.mrf.mxu0
  %550 = vdwg.mxu0
  %551 = vrot.lane.b32.xlu0 %v344, 112
  %v552 = vpop.permute.xlu0 %551
  %553 = vrot.lane.b32.xlu0 %v349, 112
  %v554 = vpop.permute.xlu0 %553
  %555 = vrot.lane.b32.xlu0 %v344, 80
  %v556 = vpop.permute.xlu0 %555
  %557 = vrot.lane.b32.xlu0 %v349, 80
  %v558 = vpop.permute.xlu0 %557
  %v559 = vsel %vm358, %v552, 0
  %v561 = vsel %vm358, %v554, 0
  %v563 = vsel %vm358, %v556, 0
  %v565 = vsel %vm358, %v558, 0
  %567 = vmatprep.subr.mxu0 0.0
  %568 = vmatpush1.xpose.msra.mxu0 0.0
  %569 = vmatprep.subr.mxu0 0.0
  %570 = vmatpush1.xpose.msra.mxu0 0.0
  %571 = vmatprep.subr.mxu0 0.0
  %572 = vmatpush1.xpose.msra.mxu0 0.0
  %573 = vmatprep.subr.mxu0 0.0
  %574 = vmatpush1.xpose.msra.mxu0 0.0
  %575 = vmatprep.subr.mxu0 0.0
  %576 = vmatpush1.xpose.msra.mxu0 0.0
  %577 = vmatprep.subr.mxu0 0.0
  %578 = vmatpush1.xpose.msra.mxu0 0.0
  %579 = vmatprep.subr.mxu0 0.0
  %580 = vmatpush1.xpose.msra.mxu0 0.0
  %581 = vmatprep.subr.mxu0 0.0
  %582 = vmatpush1.xpose.msra.mxu0 0.0
  %583 = vmatprep.subr.mxu0 0.0
  %584 = vmatpush1.xpose.msra.mxu0 0.0
  %585 = vmatprep.subr.mxu0 0.0
  %586 = vmatpush1.xpose.msra.mxu0 0.0
  %587 = vmatprep.subr.mxu0 0.0
  %588 = vmatpush1.xpose.msra.mxu0 0.0
  %589 = vmatprep.subr.mxu0 0.0
  %590 = vmatpush1.xpose.msra.mxu0 0.0
  %591 = vmatprep.subr.mxu0 0.0
  %592 = vmatpush1.xpose.msra.mxu0 0.0
  %593 = vmatprep.subr.mxu0 0.0
  %594 = vmatpush1.xpose.msra.mxu0 0.0
  %595 = vmatprep.subr.mxu0 0.0
  %596 = vmatpush1.xpose.msra.mxu0 %v565
  %597 = vmatprep.subr.mxu0 0.0
  %598 = vmatpush1.xpose.msra.mxu0 %v563
  %599 = vmatprep.subr.mxu0 0.0
  %600 = vmatpush2.xpose.msra.mxu0 0.0
  %601 = vmatprep.subr.mxu0 0.0
  %602 = vmatpush2.xpose.msra.mxu0 0.0
  %603 = vmatprep.subr.mxu0 0.0
  %604 = vmatpush2.xpose.msra.mxu0 0.0
  %605 = vmatprep.subr.mxu0 0.0
  %606 = vmatpush2.xpose.msra.mxu0 0.0
  %607 = vmatprep.subr.mxu0 0.0
  %608 = vmatpush2.xpose.msra.mxu0 0.0
  %609 = vmatprep.subr.mxu0 0.0
  %610 = vmatpush2.xpose.msra.mxu0 0.0
  %611 = vmatprep.subr.mxu0 0.0
  %612 = vmatpush2.xpose.msra.mxu0 0.0
  %613 = vmatprep.subr.mxu0 0.0
  %614 = vmatpush2.xpose.msra.mxu0 0.0
  %615 = vmatprep.subr.mxu0 0.0
  %616 = vmatpush2.xpose.msra.mxu0 0.0
  %617 = vmatprep.subr.mxu0 0.0
  %618 = vmatpush2.xpose.msra.mxu0 0.0
  %619 = vmatprep.subr.mxu0 0.0
  %620 = vmatpush2.xpose.msra.mxu0 0.0
  %621 = vmatprep.subr.mxu0 0.0
  %622 = vmatpush2.xpose.msra.mxu0 0.0
  %623 = vmatprep.subr.mxu0 0.0
  %624 = vmatpush2.xpose.msra.mxu0 0.0
  %625 = vmatprep.subr.mxu0 0.0
  %626 = vmatpush2.xpose.msra.mxu0 0.0
  %627 = vmatprep.subr.mxu0 0.0
  %628 = vmatpush2.xpose.msra.mxu0 0.0
  %629 = vmatprep.subr.mxu0 0.0
  %630 = vmatpush2.xpose.msra.mxu0 0.0
  %631 = vmatprep.mubr.f32.mxu0 0.0
  %632 = vmatmul.mubr.f32.gmra.mxu0 %v559
  %v633 = vpop.f32.mrf.mxu0
  %v634 = vadd.f32 %v258, %v633
  %v635 = vpop.f32.mrf.mxu0
  %636 = vmatprep.mubr.f32.mxu0 0.0
  %637 = vmatmul.mubr.f32.gmra.mxu0 %v561
  %v638 = vpop.f32.mrf.mxu0
  %v639 = vadd.f32 %v259, %v638
  %v640 = vpop.f32.mrf.mxu0
  %641 = vdwg.mxu0
  %v642 = vsel %vm358, %v634, -inf
  %643 = vmax.xlane.f32.xlu0 %v642
  %v644 = vpop.xlane.xlu0 %643
  %v645 = vsel %vm358, %v639, -inf
  %646 = vmax.xlane.f32.xlu0 %v645
  %v647 = vpop.xlane.xlu0 %646
  %v648 = vsub.f32 %v634, %v644
  %v649 = vsub.f32 %v639, %v647
  %v650 = vmul.f32 %v648, 1.442695
  %v651 = vpow.pop %v650
  %v652 = vmul.f32 %v649, 1.442695
  %v653 = vpow.pop %v652
  %v654 = vsel %vm358, %v651, 0.0
  %655 = vadd.xlane.f32.xlu0 %v654
  %v656 = vpop.xlane.xlu0 %655
  %v657 = vsel %vm358, %v653, 0.0
  %658 = vadd.xlane.f32.xlu0 %v657
  %v659 = vpop.xlane.xlu0 %658
  %v660 = vrcp.pop %v656
  %v661 = vrcp.pop %v659
  %v662 = vmul.f32 %v651, %v660
  %v663 = vmul.f32 %v653, %v661
  %664 = vrot.lane.b32.xlu0 %v344, 48
  %v665 = vpop.permute.xlu0 %664
  %666 = vrot.lane.b32.xlu0 %v349, 48
  %v667 = vpop.permute.xlu0 %666
  %v671 = vsel %vm358, %v662, 0
  %v674 = vsel %vm358, %v663, 0
  %676 = vmatprep.subr.mxu0 0.0
  %677 = vmatpush1.msra.mxu0 0.0
  %678 = vmatprep.subr.mxu0 0.0
  %679 = vmatpush1.msra.mxu0 0.0
  %680 = vmatprep.subr.mxu0 0.0
  %681 = vmatpush1.msra.mxu0 0.0
  %682 = vmatprep.subr.mxu0 0.0
  %683 = vmatpush1.msra.mxu0 0.0
  %684 = vmatprep.subr.mxu0 0.0
  %685 = vmatpush1.msra.mxu0 0.0
  %686 = vmatprep.subr.mxu0 0.0
  %687 = vmatpush1.msra.mxu0 0.0
  %688 = vmatprep.subr.mxu0 0.0
  %689 = vmatpush1.msra.mxu0 0.0
  %690 = vmatprep.subr.mxu0 0.0
  %691 = vmatpush1.msra.mxu0 0.0
  %692 = vmatprep.subr.mxu0 0.0
  %693 = vmatpush1.msra.mxu0 0.0
  %694 = vmatprep.subr.mxu0 0.0
  %695 = vmatpush1.msra.mxu0 0.0
  %696 = vmatprep.subr.mxu0 0.0
  %697 = vmatpush1.msra.mxu0 0.0
  %698 = vmatprep.subr.mxu0 0.0
  %699 = vmatpush1.msra.mxu0 0.0
  %700 = vmatprep.subr.mxu0 0.0
  %701 = vmatpush1.msra.mxu0 0.0
  %702 = vmatprep.subr.mxu0 0.0
  %703 = vmatpush1.msra.mxu0 0.0
  %704 = vmatprep.subr.mxu0 0.0
  %705 = vmatpush1.msra.mxu0 %v667
  %706 = vmatprep.subr.mxu0 0.0
  %707 = vmatpush1.msra.mxu0 %v665
  %708 = vmatprep.subr.mxu0 0.0
  %709 = vmatpush2.msra.mxu0 0.0
  %710 = vmatprep.subr.mxu0 0.0
  %711 = vmatpush2.msra.mxu0 0.0
  %712 = vmatprep.subr.mxu0 0.0
  %713 = vmatpush2.msra.mxu0 0.0
  %714 = vmatprep.subr.mxu0 0.0
  %715 = vmatpush2.msra.mxu0 0.0
  %716 = vmatprep.subr.mxu0 0.0
  %717 = vmatpush2.msra.mxu0 0.0
  %718 = vmatprep.subr.mxu0 0.0
  %719 = vmatpush2.msra.mxu0 0.0
  %720 = vmatprep.subr.mxu0 0.0
  %721 = vmatpush2.msra.mxu0 0.0
  %722 = vmatprep.subr.mxu0 0.0
  %723 = vmatpush2.msra.mxu0 0.0
  %724 = vmatprep.subr.mxu0 0.0
  %725 = vmatpush2.msra.mxu0 0.0
  %726 = vmatprep.subr.mxu0 0.0
  %727 = vmatpush2.msra.mxu0 0.0
  %728 = vmatprep.subr.mxu0 0.0
  %729 = vmatpush2.msra.mxu0 0.0
  %730 = vmatprep.subr.mxu0 0.0
  %731 = vmatpush2.msra.mxu0 0.0
  %732 = vmatprep.subr.mxu0 0.0
  %733 = vmatpush2.msra.mxu0 0.0
  %734 = vmatprep.subr.mxu0 0.0
  %735 = vmatpush2.msra.mxu0 0.0
  %736 = vmatprep.subr.mxu0 0.0
  %737 = vmatpush2.msra.mxu0 0.0
  %738 = vmatprep.subr.mxu0 0.0
  %739 = vmatpush2.msra.mxu0 0.0
  %740 = vmatprep.mubr.f32.mxu0 0.0
  %741 = vmatmul.mubr.f32.gmra.mxu0 %v671
  %v742 = vpop.f32.mrf.mxu0
  %v743 = vadd.f32 0.0, %v742
  %v744 = vpop.f32.mrf.mxu0
  %745 = vmatprep.mubr.f32.mxu0 0.0
  %746 = vmatmul.mubr.f32.gmra.mxu0 %v674
  %v747 = vpop.f32.mrf.mxu0
  %v748 = vadd.f32 0.0, %v747
  %v749 = vpop.f32.mrf.mxu0
  %750 = vdwg.mxu0
  %753 = vrot.lane.b32.xlu0 %v743, 16
  %v754 = vpop.permute.xlu0 %753
  %755 = vrot.lane.b32.xlu0 %v748, 16
  %v756 = vpop.permute.xlu0 %755
  %v759 = vsel %vm358, %v543, %v754
  %v760 = vsel %vm358, %v548, %v756
  %v761 = vld [vmem:[%s8] sm:$0xff]
  %v762 = vld [vmem:[%s8 + $0x8] sm:$0xff]
  %v763 = vld [vmem:[%s8 + $0x10] sm:$0xff]
  %v764 = vld [vmem:[%s8 + $0x18] sm:$0xff]
  %v765 = vld [vmem:[%s9] sm:$0x1]
  %v767 = vlaneseq
  %v768 = vshrl.u32 %v767, 7
  %v769 = vsub.s32 0, %v768
  %v770 = vrot.slane %v765, %v769
  %v773 = vsel %vm175, %v759, 0
  %v776 = vsel %vm175, %v760, 0
  %778 = vmatprep.subr.mxu0 0.0
  %779 = vmatpush1.msra.mxu0 0.0
  %780 = vmatprep.subr.mxu0 0.0
  %781 = vmatpush1.msra.mxu0 0.0
  %782 = vmatprep.subr.mxu0 0.0
  %783 = vmatpush1.msra.mxu0 0.0
  %784 = vmatprep.subr.mxu0 0.0
  %785 = vmatpush1.msra.mxu0 0.0
  %786 = vmatprep.subr.mxu0 0.0
  %787 = vmatpush1.msra.mxu0 0.0
  %788 = vmatprep.subr.mxu0 0.0
  %789 = vmatpush1.msra.mxu0 0.0
  %790 = vmatprep.subr.mxu0 0.0
  %791 = vmatpush1.msra.mxu0 0.0
  %792 = vmatprep.subr.mxu0 0.0
  %793 = vmatpush1.msra.mxu0 0.0
  %794 = vmatprep.subr.mxu0 0.0
  %795 = vmatpush1.msra.mxu0 0.0
  %796 = vmatprep.subr.mxu0 0.0
  %797 = vmatpush1.msra.mxu0 0.0
  %798 = vmatprep.subr.mxu0 0.0
  %799 = vmatpush1.msra.mxu0 0.0
  %800 = vmatprep.subr.mxu0 0.0
  %801 = vmatpush1.msra.mxu0 0.0
  %802 = vmatprep.subr.mxu0 0.0
  %803 = vmatpush1.msra.mxu0 %v764
  %804 = vmatprep.subr.mxu0 0.0
  %805 = vmatpush1.msra.mxu0 %v763
  %806 = vmatprep.subr.mxu0 0.0
  %807 = vmatpush1.msra.mxu0 %v762
  %808 = vmatprep.subr.mxu0 0.0
  %809 = vmatpush1.msra.mxu0 %v761
  %810 = vmatprep.subr.mxu0 0.0
  %811 = vmatpush2.msra.mxu0 0.0
  %812 = vmatprep.subr.mxu0 0.0
  %813 = vmatpush2.msra.mxu0 0.0
  %814 = vmatprep.subr.mxu0 0.0
  %815 = vmatpush2.msra.mxu0 0.0
  %816 = vmatprep.subr.mxu0 0.0
  %817 = vmatpush2.msra.mxu0 0.0
  %818 = vmatprep.subr.mxu0 0.0
  %819 = vmatpush2.msra.mxu0 0.0
  %820 = vmatprep.subr.mxu0 0.0
  %821 = vmatpush2.msra.mxu0 0.0
  %822 = vmatprep.subr.mxu0 0.0
  %823 = vmatpush2.msra.mxu0 0.0
  %824 = vmatprep.subr.mxu0 0.0
  %825 = vmatpush2.msra.mxu0 0.0
  %826 = vmatprep.subr.mxu0 0.0
  %827 = vmatpush2.msra.mxu0 0.0
  %828 = vmatprep.subr.mxu0 0.0
  %829 = vmatpush2.msra.mxu0 0.0
  %830 = vmatprep.subr.mxu0 0.0
  %831 = vmatpush2.msra.mxu0 0.0
  %832 = vmatprep.subr.mxu0 0.0
  %833 = vmatpush2.msra.mxu0 0.0
  %834 = vmatprep.subr.mxu0 0.0
  %835 = vmatpush2.msra.mxu0 0.0
  %836 = vmatprep.subr.mxu0 0.0
  %837 = vmatpush2.msra.mxu0 0.0
  %838 = vmatprep.subr.mxu0 0.0
  %839 = vmatpush2.msra.mxu0 0.0
  %840 = vmatprep.subr.mxu0 0.0
  %841 = vmatpush2.msra.mxu0 0.0
  %842 = vmatprep.mubr.f32.mxu0 0.0
  %843 = vmatmul.mubr.f32.gmra.mxu0 %v773
  %v844 = vpop.f32.mrf.mxu0
  %v845 = vadd.f32 %v770, %v844
  %v846 = vpop.f32.mrf.mxu0
  %847 = vmatprep.mubr.f32.mxu0 0.0
  %848 = vmatmul.mubr.f32.gmra.mxu0 %v776
  %v849 = vpop.f32.mrf.mxu0
  %v850 = vadd.f32 %v770, %v849
  %v851 = vpop.f32.mrf.mxu0
  %852 = vdwg.mxu0
  %v853 = vadd.f32 %v845, %v217
  %v854 = vadd.f32 %v850, %v218
  %v855 = vld [vmem:[%s10] sm:$0x1]
  %v856 = vld [vmem:[%s11] sm:$0x1]
  %v857 = vsel %vm175, %v853, 0.0
  %858 = vadd.xlane.f32.xlu0 %v857
  %v859 = vpop.xlane.xlu0 %858
  %v860 = vsel %vm175, %v854, 0.0
  %861 = vadd.xlane.f32.xlu0 %v860
  %v862 = vpop.xlane.xlu0 %861
  %v863 = vmul.f32 %v859, %v182
  %v864 = vmul.f32 %v862, %v182
  %v865 = vsub.f32 %v853, %v863
  %v866 = vsub.f32 %v854, %v864
  %v867 = vmul.f32 %v865, %v865
  %v868 = vmul.f32 %v866, %v866
  %v869 = vsel %vm175, %v867, 0.0
  %870 = vadd.xlane.f32.xlu0 %v869
  %v871 = vpop.xlane.xlu0 %870
  %v872 = vsel %vm175, %v868, 0.0
  %873 = vadd.xlane.f32.xlu0 %v872
  %v874 = vpop.xlane.xlu0 %873
  %v875 = vmul.f32 %v871, %v182
  %v876 = vmul.f32 %v874, %v182
  %v877 = vadd.f32 %v875, 1e-12
  %v878 = vadd.f32 %v876, 1e-12
  %v879 = vrsqrt.pop %v877
  %v880 = vrsqrt.pop %v878
  %v881 = vmul.f32 %v865, %v879
  %v882 = vmul.f32 %v866, %v880
  %v884 = vlaneseq
  %v885 = vshrl.u32 %v884, 7
  %v886 = vsub.s32 0, %v885
  %v887 = vrot.slane %v855, %v886
  %v889 = vmul.f32 %v881, %v887
  %v890 = vmul.f32 %v882, %v887
  %v892 = vlaneseq
  %v893 = vshrl.u32 %v892, 7
  %v894 = vsub.s32 0, %v893
  %v895 = vrot.slane %v856, %v894
  %v897 = vadd.f32 %v889, %v895
  %v898 = vadd.f32 %v890, %v895
  %v899 = vld [vmem:[%s12] sm:$0xff]
  %v900 = vld [vmem:[%s12 + $0x8] sm:$0xff]
  %v901 = vld [vmem:[%s12 + $0x10] sm:$0xff]
  %v902 = vld [vmem:[%s12 + $0x18] sm:$0xff]
  %v903 = vld [vmem:[%s13] sm:$0x1]
  %v905 = vlaneseq
  %v906 = vshrl.u32 %v905, 7
  %v907 = vsub.s32 0, %v906
  %v908 = vrot.slane %v903, %v907
  %v911 = vsel %vm175, %v897, 0
  %v914 = vsel %vm175, %v898, 0
  %916 = vmatprep.subr.mxu0 0.0
  %917 = vmatpush1.msra.mxu0 0.0
  %918 = vmatprep.subr.mxu0 0.0
  %919 = vmatpush1.msra.mxu0 0.0
  %920 = vmatprep.subr.mxu0 0.0
  %921 = vmatpush1.msra.mxu0 0.0
  %922 = vmatprep.subr.mxu0 0.0
  %923 = vmatpush1.msra.mxu0 0.0
  %924 = vmatprep.subr.mxu0 0.0
  %925 = vmatpush1.msra.mxu0 0.0
  %926 = vmatprep.subr.mxu0 0.0
  %927 = vmatpush1.msra.mxu0 0.0
  %928 = vmatprep.subr.mxu0 0.0
  %929 = vmatpush1.msra.mxu0 0.0
  %930 = vmatprep.subr.mxu0 0.0
  %931 = vmatpush1.msra.mxu0 0.0
  %932 = vmatprep.subr.mxu0 0.0
  %933 = vmatpush1.msra.mxu0 0.0
  %934 = vmatprep.subr.mxu0 0.0
  %935 = vmatpush1.msra.mxu0 0.0
  %936 = vmatprep.subr.mxu0 0.0
  %937 = vmatpush1.msra.mxu0 0.0
  %938 = vmatprep.subr.mxu0 0.0
  %939 = vmatpush1.msra.mxu0 0.0
  %940 = vmatprep.subr.mxu0 0.0
  %941 = vmatpush1.msra.mxu0 %v902
  %942 = vmatprep.subr.mxu0 0.0
  %943 = vmatpush1.msra.mxu0 %v901
  %944 = vmatprep.subr.mxu0 0.0
  %945 = vmatpush1.msra.mxu0 %v900
  %946 = vmatprep.subr.mxu0 0.0
  %947 = vmatpush1.msra.mxu0 %v899
  %948 = vmatprep.subr.mxu0 0.0
  %949 = vmatpush2.msra.mxu0 0.0
  %950 = vmatprep.subr.mxu0 0.0
  %951 = vmatpush2.msra.mxu0 0.0
  %952 = vmatprep.subr.mxu0 0.0
  %953 = vmatpush2.msra.mxu0 0.0
  %954 = vmatprep.subr.mxu0 0.0
  %955 = vmatpush2.msra.mxu0 0.0
  %956 = vmatprep.subr.mxu0 0.0
  %957 = vmatpush2.msra.mxu0 0.0
  %958 = vmatprep.subr.mxu0 0.0
  %959 = vmatpush2.msra.mxu0 0.0
  %960 = vmatprep.subr.mxu0 0.0
  %961 = vmatpush2.msra.mxu0 0.0
  %962 = vmatprep.subr.mxu0 0.0
  %963 = vmatpush2.msra.mxu0 0.0
  %964 = vmatprep.subr.mxu0 0.0
  %965 = vmatpush2.msra.mxu0 0.0
  %966 = vmatprep.subr.mxu0 0.0
  %967 = vmatpush2.msra.mxu0 0.0
  %968 = vmatprep.subr.mxu0 0.0
  %969 = vmatpush2.msra.mxu0 0.0
  %970 = vmatprep.subr.mxu0 0.0
  %971 = vmatpush2.msra.mxu0 0.0
  %972 = vmatprep.subr.mxu0 0.0
  %973 = vmatpush2.msra.mxu0 0.0
  %974 = vmatprep.subr.mxu0 0.0
  %975 = vmatpush2.msra.mxu0 0.0
  %976 = vmatprep.subr.mxu0 0.0
  %977 = vmatpush2.msra.mxu0 0.0
  %978 = vmatprep.subr.mxu0 0.0
  %979 = vmatpush2.msra.mxu0 0.0
  %980 = vmatprep.mubr.f32.mxu0 0.0
  %981 = vmatmul.mubr.f32.gmra.mxu0 %v911
  %v982 = vpop.f32.mrf.mxu0
  %v983 = vadd.f32 %v908, %v982
  %v984 = vpop.f32.mrf.mxu0
  %985 = vmatprep.mubr.f32.mxu0 0.0
  %986 = vmatmul.mubr.f32.gmra.mxu0 %v914
  %v987 = vpop.f32.mrf.mxu0
  %v988 = vadd.f32 %v908, %v987
  %v989 = vpop.f32.mrf.mxu0
  %990 = vdwg.mxu0
  %v991 = vmul.f32 %v983, %v983
  %v992 = vmul.f32 %v988, %v988
  %v993 = vmul.f32 %v983, %v991
  %v994 = vmul.f32 %v988, %v992
  %v995 = vmul.f32 %v993, 0.044715
  %v996 = vmul.f32 %v994, 0.044715
  %v997 = vadd.f32 %v983, %v995
  %v998 = vadd.f32 %v988, %v996
  %v999 = vmul.f32 %v997, 0.7978846
  %v1000 = vmul.f32 %v998, 0.7978846
  %v1001 = vtanh.pop %v999
  %v1002 = vtanh.pop %v1000
  %v1003 = vadd.f32 %v1001, 1.0
  %v1004 = vadd.f32 %v1002, 1.0
  %v1005 = vmul.f32 %v1003, 0.5
  %v1006 = vmul.f32 %v1004, 0.5
  %v1007 = vmul.f32 %v983, %v1005
  %v1008 = vmul.f32 %v988, %v1006
  %v1009 = vld [vmem:[%s14] sm:$0xff]
  %v1010 = vld [vmem:[%s14 + $0x8] sm:$0xff]
  %v1011 = vld [vmem:[%s14 + $0x10] sm:$0xff]
  %v1012 = vld [vmem:[%s14 + $0x18] sm:$0xff]
  %v1013 = vld [vmem:[%s14 + $0x20] sm:$0xff]
  %v1014 = vld [vmem:[%s14 + $0x28] sm:$0xff]
  %v1015 = vld [vmem:[%s14 + $0x30] sm:$0xff]
  %v1016 = vld [vmem:[%s14 + $0x38] sm:$0xff]
  %v1017 = vld [vmem:[%s15] sm:$0x1]
  %v1019 = vlaneseq
  %v1020 = vshrl.u32 %v1019, 7
  %v1021 = vsub.s32 0, %v1020
  %v1022 = vrot.slane %v1017, %v1021
  %vm1024 = vcmask 523264
  %v1026 = vsel %vm1024, %v1007, 0
  %v1029 = vsel %vm1024, %v1008, 0
  %1031 = vmatprep.subr.mxu0 0.0
  %1032 = vmatpush1.msra.mxu0 0.0
  %1033 = vmatprep.subr.mxu0 0.0
  %1034 = vmatpush1.msra.mxu0 0.0
  %1035 = vmatprep.subr.mxu0 0.0
  %1036 = vmatpush1.msra.mxu0 0.0
  %1037 = vmatprep.subr.mxu0 0.0
  %1038 = vmatpush1.msra.mxu0 0.0
  %1039 = vmatprep.subr.mxu0 0.0
  %1040 = vmatpush1.msra.mxu0 0.0
  %1041 = vmatprep.subr.mxu0 0.0
  %1042 = vmatpush1.msra.mxu0 0.0
  %1043 = vmatprep.subr.mxu0 0.0
  %1044 = vmatpush1.msra.mxu0 0.0
  %1045 = vmatprep.subr.mxu0 0.0
  %1046 = vmatpush1.msra.mxu0 0.0
  %1047 = vmatprep.subr.mxu0 0.0
  %1048 = vmatpush1.msra.mxu0 %v1016
  %1049 = vmatprep.subr.mxu0 0.0
  %1050 = vmatpush1.msra.mxu0 %v1015
  %1051 = vmatprep.subr.mxu0 0.0
  %1052 = vmatpush1.msra.mxu0 %v1014
  %1053 = vmatprep.subr.mxu0 0.0
  %1054 = vmatpush1.msra.mxu0 %v1013
  %1055 = vmatprep.subr.mxu0 0.0
  %1056 = vmatpush1.msra.mxu0 %v1012
  %1057 = vmatprep.subr.mxu0 0.0
  %1058 = vmatpush1.msra.mxu0 %v1011
  %1059 = vmatprep.subr.mxu0 0.0
  %1060 = vmatpush1.msra.mxu0 %v1010
  %1061 = vmatprep.subr.mxu0 0.0
  %1062 = vmatpush1.msra.mxu0 %v1009
  %1063 = vmatprep.subr.mxu0 0.0
  %1064 = vmatpush2.msra.mxu0 0.0
  %1065 = vmatprep.subr.mxu0 0.0
  %1066 = vmatpush2.msra.mxu0 0.0
  %1067 = vmatprep.subr.mxu0 0.0
  %1068 = vmatpush2.msra.mxu0 0.0
  %1069 = vmatprep.subr.mxu0 0.0
  %1070 = vmatpush2.msra.mxu0 0.0
  %1071 = vmatprep.subr.mxu0 0.0
  %1072 = vmatpush2.msra.mxu0 0.0
  %1073 = vmatprep.subr.mxu0 0.0
  %1074 = vmatpush2.msra.mxu0 0.0
  %1075 = vmatprep.subr.mxu0 0.0
  %1076 = vmatpush2.msra.mxu0 0.0
  %1077 = vmatprep.subr.mxu0 0.0
  %1078 = vmatpush2.msra.mxu0 0.0
  %1079 = vmatprep.subr.mxu0 0.0
  %1080 = vmatpush2.msra.mxu0 0.0
  %1081 = vmatprep.subr.mxu0 0.0
  %1082 = vmatpush2.msra.mxu0 0.0
  %1083 = vmatprep.subr.mxu0 0.0
  %1084 = vmatpush2.msra.mxu0 0.0
  %1085 = vmatprep.subr.mxu0 0.0
  %1086 = vmatpush2.msra.mxu0 0.0
  %1087 = vmatprep.subr.mxu0 0.0
  %1088 = vmatpush2.msra.mxu0 0.0
  %1089 = vmatprep.subr.mxu0 0.0
  %1090 = vmatpush2.msra.mxu0 0.0
  %1091 = vmatprep.subr.mxu0 0.0
  %1092 = vmatpush2.msra.mxu0 0.0
  %1093 = vmatprep.subr.mxu0 0.0
  %1094 = vmatpush2.msra.mxu0 0.0
  %1095 = vmatprep.mubr.f32.mxu0 0.0
  %1096 = vmatmul.mubr.f32.gmra.mxu0 %v1026
  %v1097 = vpop.f32.mrf.mxu0
  %v1098 = vadd.f32 %v1022, %v1097
  %v1099 = vpop.f32.mrf.mxu0
  %1100 = vmatprep.mubr.f32.mxu0 0.0
  %1101 = vmatmul.mubr.f32.gmra.mxu0 %v1029
  %v1102 = vpop.f32.mrf.mxu0
  %v1103 = vadd.f32 %v1022, %v1102
  %v1104 = vpop.f32.mrf.mxu0
  %1105 = vdwg.mxu0
  %v1106 = vadd.f32 %v1098, %v897
  %v1107 = vadd.f32 %v1103, %v898
  %v1108 = vld [vmem:[%s16] sm:$0x1]
  %v1109 = vld [vmem:[%s17] sm:$0x1]
  %v1110 = vsel %vm175, %v1106, 0.0
  %1111 = vadd.xlane.f32.xlu0 %v1110
  %v1112 = vpop.xlane.xlu0 %1111
  %v1113 = vsel %vm175, %v1107, 0.0
  %1114 = vadd.xlane.f32.xlu0 %v1113
  %v1115 = vpop.xlane.xlu0 %1114
  %v1116 = vmul.f32 %v1112, %v182
  %v1117 = vmul.f32 %v1115, %v182
  %v1118 = vsub.f32 %v1106, %v1116
  %v1119 = vsub.f32 %v1107, %v1117
  %v1120 = vmul.f32 %v1118, %v1118
  %v1121 = vmul.f32 %v1119, %v1119
  %v1122 = vsel %vm175, %v1120, 0.0
  %1123 = vadd.xlane.f32.xlu0 %v1122
  %v1124 = vpop.xlane.xlu0 %1123
  %v1125 = vsel %vm175, %v1121, 0.0
  %1126 = vadd.xlane.f32.xlu0 %v1125
  %v1127 = vpop.xlane.xlu0 %1126
  %v1128 = vmul.f32 %v1124, %v182
  %v1129 = vmul.f32 %v1127, %v182
  %v1130 = vadd.f32 %v1128, 1e-12
  %v1131 = vadd.f32 %v1129, 1e-12
  %v1132 = vrsqrt.pop %v1130
  %v1133 = vrsqrt.pop %v1131
  %v1134 = vmul.f32 %v1118, %v1132
  %v1135 = vmul.f32 %v1119, %v1133
  %v1137 = vlaneseq
  %v1138 = vshrl.u32 %v1137, 7
  %v1139 = vsub.s32 0, %v1138
  %v1140 = vrot.slane %v1108, %v1139
  %v1142 = vmul.f32 %v1134, %v1140
  %v1143 = vmul.f32 %v1135, %v1140
  %v1145 = vlaneseq
  %v1146 = vshrl.u32 %v1145, 7
  %v1147 = vsub.s32 0, %v1146
  %v1148 = vrot.slane %v1109, %v1147
  %v1150 = vadd.f32 %v1142, %v1148
  %v1151 = vadd.f32 %v1143, %v1148
  %s1152 = scalar_lea.vmem %s6, 32
  %v1153 = vld [vmem:[%s1152] sm:$0xff]
  %v1154 = vld [vmem:[%s1152 + $0x8] sm:$0xff]
  %v1155 = vld [vmem:[%s1152 + $0x10] sm:$0xff]
  %v1156 = vld [vmem:[%s1152 + $0x18] sm:$0xff]
  %s1157 = scalar_lea.vmem %s7, 1
  %v1158 = vld [vmem:[%s1157] sm:$0x1]
  %v1160 = vlaneseq
  %v1161 = vshrl.u32 %v1160, 7
  %v1162 = vsub.s32 0, %v1161
  %v1163 = vrot.slane %v1158, %v1162
  %v1166 = vsel %vm175, %v1150, 0
  %v1169 = vsel %vm175, %v1151, 0
  %1171 = vmatprep.subr.mxu0 0.0
  %1172 = vmatpush1.msra.mxu0 0.0
  %1173 = vmatprep.subr.mxu0 0.0
  %1174 = vmatpush1.msra.mxu0 0.0
  %1175 = vmatprep.subr.mxu0 0.0
  %1176 = vmatpush1.msra.mxu0 0.0
  %1177 = vmatprep.subr.mxu0 0.0
  %1178 = vmatpush1.msra.mxu0 0.0
  %1179 = vmatprep.subr.mxu0 0.0
  %1180 = vmatpush1.msra.mxu0 0.0
  %1181 = vmatprep.subr.mxu0 0.0
  %1182 = vmatpush1.msra.mxu0 0.0
  %1183 = vmatprep.subr.mxu0 0.0
  %1184 = vmatpush1.msra.mxu0 0.0
  %1185 = vmatprep.subr.mxu0 0.0
  %1186 = vmatpush1.msra.mxu0 0.0
  %1187 = vmatprep.subr.mxu0 0.0
  %1188 = vmatpush1.msra.mxu0 0.0
  %1189 = vmatprep.subr.mxu0 0.0
  %1190 = vmatpush1.msra.mxu0 0.0
  %1191 = vmatprep.subr.mxu0 0.0
  %1192 = vmatpush1.msra.mxu0 0.0
  %1193 = vmatprep.subr.mxu0 0.0
  %1194 = vmatpush1.msra.mxu0 0.0
  %1195 = vmatprep.subr.mxu0 0.0
  %1196 = vmatpush1.msra.mxu0 %v1156
  %1197 = vmatprep.subr.mxu0 0.0
  %1198 = vmatpush1.msra.mxu0 %v1155
  %1199 = vmatprep.subr.mxu0 0.0
  %1200 = vmatpush1.msra.mxu0 %v1154
  %1201 = vmatprep.subr.mxu0 0.0
  %1202 = vmatpush1.msra.mxu0 %v1153
  %1203 = vmatprep.subr.mxu0 0.0
  %1204 = vmatpush2.msra.mxu0 0.0
  %1205 = vmatprep.subr.mxu0 0.0
  %1206 = vmatpush2.msra.mxu0 0.0
  %1207 = vmatprep.subr.mxu0 0.0
  %1208 = vmatpush2.msra.mxu0 0.0
  %1209 = vmatprep.subr.mxu0 0.0
  %1210 = vmatpush2.msra.mxu0 0.0
  %1211 = vmatprep.subr.mxu0 0.0
  %1212 = vmatpush2.msra.mxu0 0.0
  %1213 = vmatprep.subr.mxu0 0.0
  %1214 = vmatpush2.msra.mxu0 0.0
  %1215 = vmatprep.subr.mxu0 0.0
  %1216 = vmatpush2.msra.mxu0 0.0
  %1217 = vmatprep.subr.mxu0 0.0
  %1218 = vmatpush2.msra.mxu0 0.0
  %1219 = vmatprep.subr.mxu0 0.0
  %1220 = vmatpush2.msra.mxu0 0.0
  %1221 = vmatprep.subr.mxu0 0.0
  %1222 = vmatpush2.msra.mxu0 0.0
  %1223 = vmatprep.subr.mxu0 0.0
  %1224 = vmatpush2.msra.mxu0 0.0
  %1225 = vmatprep.subr.mxu0 0.0
  %1226 = vmatpush2.msra.mxu0 0.0
  %1227 = vmatprep.subr.mxu0 0.0
  %1228 = vmatpush2.msra.mxu0 0.0
  %1229 = vmatprep.subr.mxu0 0.0
  %1230 = vmatpush2.msra.mxu0 0.0
  %1231 = vmatprep.subr.mxu0 0.0
  %1232 = vmatpush2.msra.mxu0 0.0
  %1233 = vmatprep.subr.mxu0 0.0
  %1234 = vmatpush2.msra.mxu0 0.0
  %1235 = vmatprep.mubr.f32.mxu0 0.0
  %1236 = vmatmul.mubr.f32.gmra.mxu0 %v1166
  %v1237 = vpop.f32.mrf.mxu0
  %v1238 = vadd.f32 %v1163, %v1237
  %v1239 = vpop.f32.mrf.mxu0
  %1240 = vmatprep.mubr.f32.mxu0 0.0
  %1241 = vmatmul.mubr.f32.gmra.mxu0 %v1169
  %v1242 = vpop.f32.mrf.mxu0
  %v1243 = vadd.f32 %v1163, %v1242
  %v1244 = vpop.f32.mrf.mxu0
  %1245 = vdwg.mxu0
  %1248 = vrot.lane.b32.xlu0 %v1238, 96
  %v1249 = vpop.permute.xlu0 %1248
  %1250 = vrot.lane.b32.xlu0 %v1243, 96
  %v1251 = vpop.permute.xlu0 %1250
  %v1252 = vsel %vm358, %v1238, 0
  %v1254 = vsel %vm358, %v1243, 0
  %v1256 = vsel %vm358, %v1249, 0
  %v1258 = vsel %vm358, %v1251, 0
  %1260 = vmatprep.subr.mxu0 0.0
  %1261 = vmatpush1.xpose.msra.mxu0 0.0
  %1262 = vmatprep.subr.mxu0 0.0
  %1263 = vmatpush1.xpose.msra.mxu0 0.0
  %1264 = vmatprep.subr.mxu0 0.0
  %1265 = vmatpush1.xpose.msra.mxu0 0.0
  %1266 = vmatprep.subr.mxu0 0.0
  %1267 = vmatpush1.xpose.msra.mxu0 0.0
  %1268 = vmatprep.subr.mxu0 0.0
  %1269 = vmatpush1.xpose.msra.mxu0 0.0
  %1270 = vmatprep.subr.mxu0 0.0
  %1271 = vmatpush1.xpose.msra.mxu0 0.0
  %1272 = vmatprep.subr.mxu0 0.0
  %1273 = vmatpush1.xpose.msra.mxu0 0.0
  %1274 = vmatprep.subr.mxu0 0.0
  %1275 = vmatpush1.xpose.msra.mxu0 0.0
  %1276 = vmatprep.subr.mxu0 0.0
  %1277 = vmatpush1.xpose.msra.mxu0 0.0
  %1278 = vmatprep.subr.mxu0 0.0
  %1279 = vmatpush1.xpose.msra.mxu0 0.0
  %1280 = vmatprep.subr.mxu0 0.0
  %1281 = vmatpush1.xpose.msra.mxu0 0.0
  %1282 = vmatprep.subr.mxu0 0.0
  %1283 = vmatpush1.xpose.msra.mxu0 0.0
  %1284 = vmatprep.subr.mxu0 0.0
  %1285 = vmatpush1.xpose.msra.mxu0 0.0
  %1286 = vmatprep.subr.mxu0 0.0
  %1287 = vmatpush1.xpose.msra.mxu0 0.0
  %1288 = vmatprep.subr.mxu0 0.0
  %1289 = vmatpush1.xpose.msra.mxu0 %v1258
  %1290 = vmatprep.subr.mxu0 0.0
  %1291 = vmatpush1.xpose.msra.mxu0 %v1256
  %1292 = vmatprep.subr.mxu0 0.0
  %1293 = vmatpush2.xpose.msra.mxu0 0.0
  %1294 = vmatprep.subr.mxu0 0.0
  %1295 = vmatpush2.xpose.msra.mxu0 0.0
  %1296 = vmatprep.subr.mxu0 0.0
  %1297 = vmatpush2.xpose.msra.mxu0 0.0
  %1298 = vmatprep.subr.mxu0 0.0
  %1299 = vmatpush2.xpose.msra.mxu0 0.0
  %1300 = vmatprep.subr.mxu0 0.0
  %1301 = vmatpush2.xpose.msra.mxu0 0.0
  %1302 = vmatprep.subr.mxu0 0.0
  %1303 = vmatpush2.xpose.msra.mxu0 0.0
  %1304 = vmatprep.subr.mxu0 0.0
  %1305 = vmatpush2.xpose.msra.mxu0 0.0
  %1306 = vmatprep.subr.mxu0 0.0
  %1307 = vmatpush2.xpose.msra.mxu0 0.0
  %1308 = vmatprep.subr.mxu0 0.0
  %1309 = vmatpush2.xpose.msra.mxu0 0.0
  %1310 = vmatprep.subr.mxu0 0.0
  %1311 = vmatpush2.xpose.msra.mxu0 0.0
  %1312 = vmatprep.subr.mxu0 0.0
  %1313 = vmatpush2.xpose.msra.mxu0 0.0
  %1314 = vmatprep.subr.mxu0 0.0
  %1315 = vmatpush2.xpose.msra.mxu0 0.0
  %1316 = vmatprep.subr.mxu0 0.0
  %1317 = vmatpush2.xpose.msra.mxu0 0.0
  %1318 = vmatprep.subr.mxu0 0.0
  %1319 = vmatpush2.xpose.msra.mxu0 0.0
  %1320 = vmatprep.subr.mxu0 0.0
  %1321 = vmatpush2.xpose.msra.mxu0 0.0
  %1322 = vmatprep.subr.mxu0 0.0
  %1323 = vmatpush2.xpose.msra.mxu0 0.0
  %1324 = vmatprep.mubr.f32.mxu0 0.0
  %1325 = vmatmul.mubr.f32.gmra.mxu0 %v1252
  %v1326 = vpop.f32.mrf.mxu0
  %v1327 = vadd.f32 %v258, %v1326
  %v1328 = vpop.f32.mrf.mxu0
  %1329 = vmatprep.mubr.f32.mxu0 0.0
  %1330 = vmatmul.mubr.f32.gmra.mxu0 %v1254
  %v1331 = vpop.f32.mrf.mxu0
  %v1332 = vadd.f32 %v259, %v1331
  %v1333 = vpop.f32.mrf.mxu0
  %1334 = vdwg.mxu0
  %v1335 = vsel %vm358, %v1327, -inf
  %1336 = vmax.xlane.f32.xlu0 %v1335
  %v1337 = vpop.xlane.xlu0 %1336
  %v1338 = vsel %vm358, %v1332, -inf
  %1339 = vmax.xlane.f32.xlu0 %v1338
  %v1340 = vpop.xlane.xlu0 %1339
  %v1341 = vsub.f32 %v1327, %v1337
  %v1342 = vsub.f32 %v1332, %v1340
  %v1343 = vmul.f32 %v1341, 1.442695
  %v1344 = vpow.pop %v1343
  %v1345 = vmul.f32 %v1342, 1.442695
  %v1346 = vpow.pop %v1345
  %v1347 = vsel %vm358, %v1344, 0.0
  %1348 = vadd.xlane.f32.xlu0 %v1347
  %v1349 = vpop.xlane.xlu0 %1348
  %v1350 = vsel %vm358, %v1346, 0.0
  %1351 = vadd.xlane.f32.xlu0 %v1350
  %v1352 = vpop.xlane.xlu0 %1351
  %v1353 = vrcp.pop %v1349
  %v1354 = vrcp.pop %v1352
  %v1355 = vmul.f32 %v1344, %v1353
  %v1356 = vmul.f32 %v1346, %v1354
  %1357 = vrot.lane.b32.xlu0 %v1238, 64
  %v1358 = vpop.permute.xlu0 %1357
  %1359 = vrot.lane.b32.xlu0 %v1243, 64
  %v1360 = vpop.permute.xlu0 %1359
  %v1364 = vsel %vm358, %v1355, 0
  %v1367 = vsel %vm358, %v1356, 0
  %1369 = vmatprep.subr.mxu0 0.0
  %1370 = vmatpush1.msra.mxu0 0.0
  %1371 = vmatprep.subr.mxu0 0.0
  %1372 = vmatpush1.msra.mxu0 0.0
  %1373 = vmatprep.subr.mxu0 0.0
  %1374 = vmatpush1.msra.mxu0 0.0
  %1375 = vmatprep.subr.mxu0 0.0
  %1376 = vmatpush1.msra.mxu0 0.0
  %1377 = vmatprep.subr.mxu0 0.0
  %1378 = vmatpush1.msra.mxu0 0.0
  %1379 = vmatprep.subr.mxu0 0.0
  %1380 = vmatpush1.msra.mxu0 0.0
  %1381 = vmatprep.subr.mxu0 0.0
  %1382 = vmatpush1.msra.mxu0 0.0
  %1383 = vmatprep.subr.mxu0 0.0
  %1384 = vmatpush1.msra.mxu0 0.0
  %1385 = vmatprep.subr.mxu0 0.0
  %1386 = vmatpush1.msra.mxu0 0.0
  %1387 = vmatprep.subr.mxu0 0.0
  %1388 = vmatpush1.msra.mxu0 0.0
  %1389 = vmatprep.subr.mxu0 0.0
  %1390 = vmatpush1.msra.mxu0 0.0
  %1391 = vmatprep.subr.mxu0 0.0
  %1392 = vmatpush1.msra.mxu0 0.0
  %1393 = vmatprep.subr.mxu0 0.0
  %1394 = vmatpush1.msra.mxu0 0.0
  %1395 = vmatprep.subr.mxu0 0.0
  %1396 = vmatpush1.msra.mxu0 0.0
  %1397 = vmatprep.subr.mxu0 0.0
  %1398 = vmatpush1.msra.mxu0 %v1360
  %1399 = vmatprep.subr.mxu0 0.0
  %1400 = vmatpush1.msra.mxu0 %v1358
  %1401 = vmatprep.subr.mxu0 0.0
  %1402 = vmatpush2.msra.mxu0 0.0
  %1403 = vmatprep.subr.mxu0 0.0
  %1404 = vmatpush2.msra.mxu0 0.0
  %1405 = vmatprep.subr.mxu0 0.0
  %1406 = vmatpush2.msra.mxu0 0.0
  %1407 = vmatprep.subr.mxu0 0.0
  %1408 = vmatpush2.msra.mxu0 0.0
  %1409 = vmatprep.subr.mxu0 0.0
  %1410 = vmatpush2.msra.mxu0 0.0
  %1411 = vmatprep.subr.mxu0 0.0
  %1412 = vmatpush2.msra.mxu0 0.0
  %1413 = vmatprep.subr.mxu0 0.0
  %1414 = vmatpush2.msra.mxu0 0.0
  %1415 = vmatprep.subr.mxu0 0.0
  %1416 = vmatpush2.msra.mxu0 0.0
  %1417 = vmatprep.subr.mxu0 0.0
  %1418 = vmatpush2.msra.mxu0 0.0
  %1419 = vmatprep.subr.mxu0 0.0
  %1420 = vmatpush2.msra.mxu0 0.0
  %1421 = vmatprep.subr.mxu0 0.0
  %1422 = vmatpush2.msra.mxu0 0.0
  %1423 = vmatprep.subr.mxu0 0.0
  %1424 = vmatpush2.msra.mxu0 0.0
  %1425 = vmatprep.subr.mxu0 0.0
  %1426 = vmatpush2.msra.mxu0 0.0
  %1427 = vmatprep.subr.mxu0 0.0
  %1428 = vmatpush2.msra.mxu0 0.0
  %1429 = vmatprep.subr.mxu0 0.0
  %1430 = vmatpush2.msra.mxu0 0.0
  %1431 = vmatprep.subr.mxu0 0.0
  %1432 = vmatpush2.msra.mxu0 0.0
  %1433 = vmatprep.mubr.f32.mxu0 0.0
  %1434 = vmatmul.mubr.f32.gmra.mxu0 %v1364
  %v1435 = vpop.f32.mrf.mxu0
  %v1436 = vadd.f32 0.0, %v1435
  %v1437 = vpop.f32.mrf.mxu0
  %1438 = vmatprep.mubr.f32.mxu0 0.0
  %1439 = vmatmul.mubr.f32.gmra.mxu0 %v1367
  %v1440 = vpop.f32.mrf.mxu0
  %v1441 = vadd.f32 0.0, %v1440
  %v1442 = vpop.f32.mrf.mxu0
  %1443 = vdwg.mxu0
  %1444 = vrot.lane.b32.xlu0 %v1238, 112
  %v1445 = vpop.permute.xlu0 %1444
  %1446 = vrot.lane.b32.xlu0 %v1243, 112
  %v1447 = vpop.permute.xlu0 %1446
  %1448 = vrot.lane.b32.xlu0 %v1238, 80
  %v1449 = vpop.permute.xlu0 %1448
  %1450 = vrot.lane.b32.xlu0 %v1243, 80
  %v1451 = vpop.permute.xlu0 %1450
  %v1452 = vsel %vm358, %v1445, 0
  %v1454 = vsel %vm358, %v1447, 0
  %v1456 = vsel %vm358, %v1449, 0
  %v1458 = vsel %vm358, %v1451, 0
  %1460 = vmatprep.subr.mxu0 0.0
  %1461 = vmatpush1.xpose.msra.mxu0 0.0
  %1462 = vmatprep.subr.mxu0 0.0
  %1463 = vmatpush1.xpose.msra.mxu0 0.0
  %1464 = vmatprep.subr.mxu0 0.0
  %1465 = vmatpush1.xpose.msra.mxu0 0.0
  %1466 = vmatprep.subr.mxu0 0.0
  %1467 = vmatpush1.xpose.msra.mxu0 0.0
  %1468 = vmatprep.subr.mxu0 0.0
  %1469 = vmatpush1.xpose.msra.mxu0 0.0
  %1470 = vmatprep.subr.mxu0 0.0
  %1471 = vmatpush1.xpose.msra.mxu0 0.0
  %1472 = vmatprep.subr.mxu0 0.0
  %1473 = vmatpush1.xpose.msra.mxu0 0.0
  %1474 = vmatprep.subr.mxu0 0.0
  %1475 = vmatpush1.xpose.msra.mxu0 0.0
  %1476 = vmatprep.subr.mxu0 0.0
  %1477 = vmatpush1.xpose.msra.mxu0 0.0
  %1478 = vmatprep.subr.mxu0 0.0
  %1479 = vmatpush1.xpose.msra.mxu0 0.0
  %1480 = vmatprep.subr.mxu0 0.0
  %1481 = vmatpush1.xpose.msra.mxu0 0.0
  %1482 = vmatprep.subr.mxu0 0.0
  %1483 = vmatpush1.xpose.msra.mxu0 0.0
  %1484 = vmatprep.subr.mxu0 0.0
  %1485 = vmatpush1.xpose.msra.mxu0 0.0
  %1486 = vmatprep.subr.mxu0 0.0
  %1487 = vmatpush1.xpose.msra.mxu0 0.0
  %1488 = vmatprep.subr.mxu0 0.0
  %1489 = vmatpush1.xpose.msra.mxu0 %v1458
  %1490 = vmatprep.subr.mxu0 0.0
  %1491 = vmatpush1.xpose.msra.mxu0 %v1456
  %1492 = vmatprep.subr.mxu0 0.0
  %1493 = vmatpush2.xpose.msra.mxu0 0.0
  %1494 = vmatprep.subr.mxu0 0.0
  %1495 = vmatpush2.xpose.msra.mxu0 0.0
  %1496 = vmatprep.subr.mxu0 0.0
  %1497 = vmatpush2.xpose.msra.mxu0 0.0
  %1498 = vmatprep.subr.mxu0 0.0
  %1499 = vmatpush2.xpose.msra.mxu0 0.0
  %1500 = vmatprep.subr.mxu0 0.0
  %1501 = vmatpush2.xpose.msra.mxu0 0.0
  %1502 = vmatprep.subr.mxu0 0.0
  %1503 = vmatpush2.xpose.msra.mxu0 0.0
  %1504 = vmatprep.subr.mxu0 0.0
  %1505 = vmatpush2.xpose.msra.mxu0 0.0
  %1506 = vmatprep.subr.mxu0 0.0
  %1507 = vmatpush2.xpose.msra.mxu0 0.0
  %1508 = vmatprep.subr.mxu0 0.0
  %1509 = vmatpush2.xpose.msra.mxu0 0.0
  %1510 = vmatprep.subr.mxu0 0.0
  %1511 = vmatpush2.xpose.msra.mxu0 0.0
  %1512 = vmatprep.subr.mxu0 0.0
  %1513 = vmatpush2.xpose.msra.mxu0 0.0
  %1514 = vmatprep.subr.mxu0 0.0
  %1515 = vmatpush2.xpose.msra.mxu0 0.0
  %1516 = vmatprep.subr.mxu0 0.0
  %1517 = vmatpush2.xpose.msra.mxu0 0.0
  %1518 = vmatprep.subr.mxu0 0.0
  %1519 = vmatpush2.xpose.msra.mxu0 0.0
  %1520 = vmatprep.subr.mxu0 0.0
  %1521 = vmatpush2.xpose.msra.mxu0 0.0
  %1522 = vmatprep.subr.mxu0 0.0
  %1523 = vmatpush2.xpose.msra.mxu0 0.0
  %1524 = vmatprep.mubr.f32.mxu0 0.0
  %1525 = vmatmul.mubr.f32.gmra.mxu0 %v1452
  %v1526 = vpop.f32.mrf.mxu0
  %v1527 = vadd.f32 %v258, %v1526
  %v1528 = vpop.f32.mrf.mxu0
  %1529 = vmatprep.mubr.f32.mxu0 0.0
  %1530 = vmatmul.mubr.f32.gmra.mxu0 %v1454
  %v1531 = vpop.f32.mrf.mxu0
  %v1532 = vadd.f32 %v259, %v1531
  %v1533 = vpop.f32.mrf.mxu0
  %1534 = vdwg.mxu0
  %v1535 = vsel %vm358, %v1527, -inf
  %1536 = vmax.xlane.f32.xlu0 %v1535
  %v1537 = vpop.xlane.xlu0 %1536
  %v1538 = vsel %vm358, %v1532, -inf
  %1539 = vmax.xlane.f32.xlu0 %v1538
  %v1540 = vpop.xlane.xlu0 %1539
  %v1541 = vsub.f32 %v1527, %v1537
  %v1542 = vsub.f32 %v1532, %v1540
  %v1543 = vmul.f32 %v1541, 1.442695
  %v1544 = vpow.pop %v1543
  %v1545 = vmul.f32 %v1542, 1.442695
  %v1546 = vpow.pop %v1545
  %v1547 = vsel %vm358, %v1544, 0.0
  %1548 = vadd.xlane.f32.xlu0 %v1547
  %v1549 = vpop.xlane.xlu0 %1548
  %v1550 = vsel %vm358, %v1546, 0.0
  %1551 = vadd.xlane.f32.xlu0 %v1550
  %v1552 = vpop.xlane.xlu0 %1551
  %v1553 = vrcp.pop %v1549
  %v1554 = vrcp.pop %v1552
  %v1555 = vmul.f32 %v1544, %v1553
  %v1556 = vmul.f32 %v1546, %v1554
  %1557 = vrot.lane.b32.xlu0 %v1238, 48
  %v1558 = vpop.permute.xlu0 %1557
  %1559 = vrot.lane.b32.xlu0 %v1243, 48
  %v1560 = vpop.permute.xlu0 %1559
  %v1564 = vsel %vm358, %v1555, 0
  %v1567 = vsel %vm358, %v1556, 0
  %1569 = vmatprep.subr.mxu0 0.0
  %1570 = vmatpush1.msra.mxu0 0.0
  %1571 = vmatprep.subr.mxu0 0.0
  %1572 = vmatpush1.msra.mxu0 0.0
  %1573 = vmatprep.subr.mxu0 0.0
  %1574 = vmatpush1.msra.mxu0 0.0
  %1575 = vmatprep.subr.mxu0 0.0
  %1576 = vmatpush1.msra.mxu0 0.0
  %1577 = vmatprep.subr.mxu0 0.0
  %1578 = vmatpush1.msra.mxu0 0.0
  %1579 = vmatprep.subr.mxu0 0.0
  %1580 = vmatpush1.msra.mxu0 0.0
  %1581 = vmatprep.subr.mxu0 0.0
  %1582 = vmatpush1.msra.mxu0 0.0
  %1583 = vmatprep.subr.mxu0 0.0
  %1584 = vmatpush1.msra.mxu0 0.0
  %1585 = vmatprep.subr.mxu0 0.0
  %1586 = vmatpush1.msra.mxu0 0.0
  %1587 = vmatprep.subr.mxu0 0.0
  %1588 = vmatpush1.msra.mxu0 0.0
  %1589 = vmatprep.subr.mxu0 0.0
  %1590 = vmatpush1.msra.mxu0 0.0
  %1591 = vmatprep.subr.mxu0 0.0
  %1592 = vmatpush1.msra.mxu0 0.0
  %1593 = vmatprep.subr.mxu0 0.0
  %1594 = vmatpush1.msra.mxu0 0.0
  %1595 = vmatprep.subr.mxu0 0.0
  %1596 = vmatpush1.msra.mxu0 0.0
  %1597 = vmatprep.subr.mxu0 0.0
  %1598 = vmatpush1.msra.mxu0 %v1560
  %1599 = vmatprep.subr.mxu0 0.0
  %1600 = vmatpush1.msra.mxu0 %v1558
  %1601 = vmatprep.subr.mxu0 0.0
  %1602 = vmatpush2.msra.mxu0 0.0
  %1603 = vmatprep.subr.mxu0 0.0
  %1604 = vmatpush2.msra.mxu0 0.0
  %1605 = vmatprep.subr.mxu0 0.0
  %1606 = vmatpush2.msra.mxu0 0.0
  %1607 = vmatprep.subr.mxu0 0.0
  %1608 = vmatpush2.msra.mxu0 0.0
  %1609 = vmatprep.subr.mxu0 0.0
  %1610 = vmatpush2.msra.mxu0 0.0
  %1611 = vmatprep.subr.mxu0 0.0
  %1612 = vmatpush2.msra.mxu0 0.0
  %1613 = vmatprep.subr.mxu0 0.0
  %1614 = vmatpush2.msra.mxu0 0.0
  %1615 = vmatprep.subr.mxu0 0.0
  %1616 = vmatpush2.msra.mxu0 0.0
  %1617 = vmatprep.subr.mxu0 0.0
  %1618 = vmatpush2.msra.mxu0 0.0
  %1619 = vmatprep.subr.mxu0 0.0
  %1620 = vmatpush2.msra.mxu0 0.0
  %1621 = vmatprep.subr.mxu0 0.0
  %1622 = vmatpush2.msra.mxu0 0.0
  %1623 = vmatprep.subr.mxu0 0.0
  %1624 = vmatpush2.msra.mxu0 0.0
  %1625 = vmatprep.subr.mxu0 0.0
  %1626 = vmatpush2.msra.mxu0 0.0
  %1627 = vmatprep.subr.mxu0 0.0
  %1628 = vmatpush2.msra.mxu0 0.0
  %1629 = vmatprep.subr.mxu0 0.0
  %1630 = vmatpush2.msra.mxu0 0.0
  %1631 = vmatprep.subr.mxu0 0.0
  %1632 = vmatpush2.msra.mxu0 0.0
  %1633 = vmatprep.mubr.f32.mxu0 0.0
  %1634 = vmatmul.mubr.f32.gmra.mxu0 %v1564
  %v1635 = vpop.f32.mrf.mxu0
  %v1636 = vadd.f32 0.0, %v1635
  %v1637 = vpop.f32.mrf.mxu0
  %1638 = vmatprep.mubr.f32.mxu0 0.0
  %1639 = vmatmul.mubr.f32.gmra.mxu0 %v1567
  %v1640 = vpop.f32.mrf.mxu0
  %v1641 = vadd.f32 0.0, %v1640
  %v1642 = vpop.f32.mrf.mxu0
  %1643 = vdwg.mxu0
  %1646 = vrot.lane.b32.xlu0 %v1636, 16
  %v1647 = vpop.permute.xlu0 %1646
  %1648 = vrot.lane.b32.xlu0 %v1641, 16
  %v1649 = vpop.permute.xlu0 %1648
  %v1652 = vsel %vm358, %v1436, %v1647
  %v1653 = vsel %vm358, %v1441, %v1649
  %s1654 = scalar_lea.vmem %s8, 32
  %v1655 = vld [vmem:[%s1654] sm:$0xff]
  %v1656 = vld [vmem:[%s1654 + $0x8] sm:$0xff]
  %v1657 = vld [vmem:[%s1654 + $0x10] sm:$0xff]
  %v1658 = vld [vmem:[%s1654 + $0x18] sm:$0xff]
  %s1659 = scalar_lea.vmem %s9, 1
  %v1660 = vld [vmem:[%s1659] sm:$0x1]
  %v1662 = vlaneseq
  %v1663 = vshrl.u32 %v1662, 7
  %v1664 = vsub.s32 0, %v1663
  %v1665 = vrot.slane %v1660, %v1664
  %v1668 = vsel %vm175, %v1652, 0
  %v1671 = vsel %vm175, %v1653, 0
  %1673 = vmatprep.subr.mxu0 0.0
  %1674 = vmatpush1.msra.mxu0 0.0
  %1675 = vmatprep.subr.mxu0 0.0
  %1676 = vmatpush1.msra.mxu0 0.0
  %1677 = vmatprep.subr.mxu0 0.0
  %1678 = vmatpush1.msra.mxu0 0.0
  %1679 = vmatprep.subr.mxu0 0.0
  %1680 = vmatpush1.msra.mxu0 0.0
  %1681 = vmatprep.subr.mxu0 0.0
  %1682 = vmatpush1.msra.mxu0 0.0
  %1683 = vmatprep.subr.mxu0 0.0
  %1684 = vmatpush1.msra.mxu0 0.0
  %1685 = vmatprep.subr.mxu0 0.0
  %1686 = vmatpush1.msra.mxu0 0.0
  %1687 = vmatprep.subr.mxu0 0.0
  %1688 = vmatpush1.msra.mxu0 0.0
  %1689 = vmatprep.subr.mxu0 0.0
  %1690 = vmatpush1.msra.mxu0 0.0
  %1691 = vmatprep.subr.mxu0 0.0
  %1692 = vmatpush1.msra.mxu0 0.0
  %1693 = vmatprep.subr.mxu0 0.0
  %1694 = vmatpush1.msra.mxu0 0.0
  %1695 = vmatprep.subr.mxu0 0.0
  %1696 = vmatpush1.msra.mxu0 0.0
  %1697 = vmatprep.subr.mxu0 0.0
  %1698 = vmatpush1.msra.mxu0 %v1658
  %1699 = vmatprep.subr.mxu0 0.0
  %1700 = vmatpush1.msra.mxu0 %v1657
  %1701 = vmatprep.subr.mxu0 0.0
  %1702 = vmatpush1.msra.mxu0 %v1656
  %1703 = vmatprep.subr.mxu0 0.0
  %1704 = vmatpush1.msra.mxu0 %v1655
  %1705 = vmatprep.subr.mxu0 0.0
  %1706 = vmatpush2.msra.mxu0 0.0
  %1707 = vmatprep.subr.mxu0 0.0
  %1708 = vmatpush2.msra.mxu0 0.0
  %1709 = vmatprep.subr.mxu0 0.0
  %1710 = vmatpush2.msra.mxu0 0.0
  %1711 = vmatprep.subr.mxu0 0.0
  %1712 = vmatpush2.msra.mxu0 0.0
  %1713 = vmatprep.subr.mxu0 0.0
  %1714 = vmatpush2.msra.mxu0 0.0
  %1715 = vmatprep.subr.mxu0 0.0
  %1716 = vmatpush2.msra.mxu0 0.0
  %1717 = vmatprep.subr.mxu0 0.0
  %1718 = vmatpush2.msra.mxu0 0.0
  %1719 = vmatprep.subr.mxu0 0.0
  %1720 = vmatpush2.msra.mxu0 0.0
  %1721 = vmatprep.subr.mxu0 0.0
  %1722 = vmatpush2.msra.mxu0 0.0
  %1723 = vmatprep.subr.mxu0 0.0
  %1724 = vmatpush2.msra.mxu0 0.0
  %1725 = vmatprep.subr.mxu0 0.0
  %1726 = vmatpush2.msra.mxu0 0.0
  %1727 = vmatprep.subr.mxu0 0.0
  %1728 = vmatpush2.msra.mxu0 0.0
  %1729 = vmatprep.subr.mxu0 0.0
  %1730 = vmatpush2.msra.mxu0 0.0
  %1731 = vmatprep.subr.mxu0 0.0
  %1732 = vmatpush2.msra.mxu0 0.0
  %1733 = vmatprep.subr.mxu0 0.0
  %1734 = vmatpush2.msra.mxu0 0.0
  %1735 = vmatprep.subr.mxu0 0.0
  %1736 = vmatpush2.msra.mxu0 0.0
  %1737 = vmatprep.mubr.f32.mxu0 0.0
  %1738 = vmatmul.mubr.f32.gmra.mxu0 %v1668
  %v1739 = vpop.f32.mrf.mxu0
  %v1740 = vadd.f32 %v1665, %v1739
  %v1741 = vpop.f32.mrf.mxu0
  %1742 = vmatprep.mubr.f32.mxu0 0.0
  %1743 = vmatmul.mubr.f32.gmra.mxu0 %v1671
  %v1744 = vpop.f32.mrf.mxu0
  %v1745 = vadd.f32 %v1665, %v1744
  %v1746 = vpop.f32.mrf.mxu0
  %1747 = vdwg.mxu0
  %v1748 = vadd.f32 %v1740, %v1150
  %v1749 = vadd.f32 %v1745, %v1151
  %s1750 = scalar_lea.vmem %s10, 1
  %v1751 = vld [vmem:[%s1750] sm:$0x1]
  %s1752 = scalar_lea.vmem %s11, 1
  %v1753 = vld [vmem:[%s1752] sm:$0x1]
  %v1754 = vsel %vm175, %v1748, 0.0
  %1755 = vadd.xlane.f32.xlu0 %v1754
  %v1756 = vpop.xlane.xlu0 %1755
  %v1757 = vsel %vm175, %v1749, 0.0
  %1758 = vadd.xlane.f32.xlu0 %v1757
  %v1759 = vpop.xlane.xlu0 %1758
  %v1760 = vmul.f32 %v1756, %v182
  %v1761 = vmul.f32 %v1759, %v182
  %v1762 = vsub.f32 %v1748, %v1760
  %v1763 = vsub.f32 %v1749, %v1761
  %v1764 = vmul.f32 %v1762, %v1762
  %v1765 = vmul.f32 %v1763, %v1763
  %v1766 = vsel %vm175, %v1764, 0.0
  %1767 = vadd.xlane.f32.xlu0 %v1766
  %v1768 = vpop.xlane.xlu0 %1767
  %v1769 = vsel %vm175, %v1765, 0.0
  %1770 = vadd.xlane.f32.xlu0 %v1769
  %v1771 = vpop.xlane.xlu0 %1770
  %v1772 = vmul.f32 %v1768, %v182
  %v1773 = vmul.f32 %v1771, %v182
  %v1774 = vadd.f32 %v1772, 1e-12
  %v1775 = vadd.f32 %v1773, 1e-12
  %v1776 = vrsqrt.pop %v1774
  %v1777 = vrsqrt.pop %v1775
  %v1778 = vmul.f32 %v1762, %v1776
  %v1779 = vmul.f32 %v1763, %v1777
  %v1781 = vlaneseq
  %v1782 = vshrl.u32 %v1781, 7
  %v1783 = vsub.s32 0, %v1782
  %v1784 = vrot.slane %v1751, %v1783
  %v1786 = vmul.f32 %v1778, %v1784
  %v1787 = vmul.f32 %v1779, %v1784
  %v1789 = vlaneseq
  %v1790 = vshrl.u32 %v1789, 7
  %v1791 = vsub.s32 0, %v1790
  %v1792 = vrot.slane %v1753, %v1791
  %v1794 = vadd.f32 %v1786, %v1792
  %v1795 = vadd.f32 %v1787, %v1792
  %s1796 = scalar_lea.vmem %s12, 32
  %v1797 = vld [vmem:[%s1796] sm:$0xff]
  %v1798 = vld [vmem:[%s1796 + $0x8] sm:$0xff]
  %v1799 = vld [vmem:[%s1796 + $0x10] sm:$0xff]
  %v1800 = vld [vmem:[%s1796 + $0x18] sm:$0xff]
  %s1801 = scalar_lea.vmem %s13, 1
  %v1802 = vld [vmem:[%s1801] sm:$0x1]
  %v1804 = vlaneseq
  %v1805 = vshrl.u32 %v1804, 7
  %v1806 = vsub.s32 0, %v1805
  %v1807 = vrot.slane %v1802, %v1806
  %v1810 = vsel %vm175, %v1794, 0
  %v1813 = vsel %vm175, %v1795, 0
  %1815 = vmatprep.subr.mxu0 0.0
  %1816 = vmatpush1.msra.mxu0 0.0
  %1817 = vmatprep.subr.mxu0 0.0
  %1818 = vmatpush1.msra.mxu0 0.0
  %1819 = vmatprep.subr.mxu0 0.0
  %1820 = vmatpush1.msra.mxu0 0.0
  %1821 = vmatprep.subr.mxu0 0.0
  %1822 = vmatpush1.msra.mxu0 0.0
  %1823 = vmatprep.subr.mxu0 0.0
  %1824 = vmatpush1.msra.mxu0 0.0
  %1825 = vmatprep.subr.mxu0 0.0
  %1826 = vmatpush1.msra.mxu0 0.0
  %1827 = vmatprep.subr.mxu0 0.0
  %1828 = vmatpush1.msra.mxu0 0.0
  %1829 = vmatprep.subr.mxu0 0.0
  %1830 = vmatpush1.msra.mxu0 0.0
  %1831 = vmatprep.subr.mxu0 0.0
  %1832 = vmatpush1.msra.mxu0 0.0
  %1833 = vmatprep.subr.mxu0 0.0
  %1834 = vmatpush1.msra.mxu0 0.0
  %1835 = vmatprep.subr.mxu0 0.0
  %1836 = vmatpush1.msra.mxu0 0.0
  %1837 = vmatprep.subr.mxu0 0.0
  %1838 = vmatpush1.msra.mxu0 0.0
  %1839 = vmatprep.subr.mxu0 0.0
  %1840 = vmatpush1.msra.mxu0 %v1800
  %1841 = vmatprep.subr.mxu0 0.0
  %1842 = vmatpush1.msra.mxu0 %v1799
  %1843 = vmatprep.subr.mxu0 0.0
  %1844 = vmatpush1.msra.mxu0 %v1798
  %1845 = vmatprep.subr.mxu0 0.0
  %1846 = vmatpush1.msra.mxu0 %v1797
  %1847 = vmatprep.subr.mxu0 0.0
  %1848 = vmatpush2.msra.mxu0 0.0
  %1849 = vmatprep.subr.mxu0 0.0
  %1850 = vmatpush2.msra.mxu0 0.0
  %1851 = vmatprep.subr.mxu0 0.0
  %1852 = vmatpush2.msra.mxu0 0.0
  %1853 = vmatprep.subr.mxu0 0.0
  %1854 = vmatpush2.msra.mxu0 0.0
  %1855 = vmatprep.subr.mxu0 0.0
  %1856 = vmatpush2.msra.mxu0 0.0
  %1857 = vmatprep.subr.mxu0 0.0
  %1858 = vmatpush2.msra.mxu0 0.0
  %1859 = vmatprep.subr.mxu0 0.0
  %1860 = vmatpush2.msra.mxu0 0.0
  %1861 = vmatprep.subr.mxu0 0.0
  %1862 = vmatpush2.msra.mxu0 0.0
  %1863 = vmatprep.subr.mxu0 0.0
  %1864 = vmatpush2.msra.mxu0 0.0
  %1865 = vmatprep.subr.mxu0 0.0
  %1866 = vmatpush2.msra.mxu0 0.0
  %1867 = vmatprep.subr.mxu0 0.0
  %1868 = vmatpush2.msra.mxu0 0.0
  %1869 = vmatprep.subr.mxu0 0.0
  %1870 = vmatpush2.msra.mxu0 0.0
  %1871 = vmatprep.subr.mxu0 0.0
  %1872 = vmatpush2.msra.mxu0 0.0
  %1873 = vmatprep.subr.mxu0 0.0
  %1874 = vmatpush2.msra.mxu0 0.0
  %1875 = vmatprep.subr.mxu0 0.0
  %1876 = vmatpush2.msra.mxu0 0.0
  %1877 = vmatprep.subr.mxu0 0.0
  %1878 = vmatpush2.msra.mxu0 0.0
  %1879 = vmatprep.mubr.f32.mxu0 0.0
  %1880 = vmatmul.mubr.f32.gmra.mxu0 %v1810
  %v1881 = vpop.f32.mrf.mxu0
  %v1882 = vadd.f32 %v1807, %v1881
  %v1883 = vpop.f32.mrf.mxu0
  %1884 = vmatprep.mubr.f32.mxu0 0.0
  %1885 = vmatmul.mubr.f32.gmra.mxu0 %v1813
  %v1886 = vpop.f32.mrf.mxu0
  %v1887 = vadd.f32 %v1807, %v1886
  %v1888 = vpop.f32.mrf.mxu0
  %1889 = vdwg.mxu0
  %v1890 = vmul.f32 %v1882, %v1882
  %v1891 = vmul.f32 %v1887, %v1887
  %v1892 = vmul.f32 %v1882, %v1890
  %v1893 = vmul.f32 %v1887, %v1891
  %v1894 = vmul.f32 %v1892, 0.044715
  %v1895 = vmul.f32 %v1893, 0.044715
  %v1896 = vadd.f32 %v1882, %v1894
  %v1897 = vadd.f32 %v1887, %v1895
  %v1898 = vmul.f32 %v1896, 0.7978846
  %v1899 = vmul.f32 %v1897, 0.7978846
  %v1900 = vtanh.pop %v1898
  %v1901 = vtanh.pop %v1899
  %v1902 = vadd.f32 %v1900, 1.0
  %v1903 = vadd.f32 %v1901, 1.0
  %v1904 = vmul.f32 %v1902, 0.5
  %v1905 = vmul.f32 %v1903, 0.5
  %v1906 = vmul.f32 %v1882, %v1904
  %v1907 = vmul.f32 %v1887, %v1905
  %s1908 = scalar_lea.vmem %s14, 64
  %v1909 = vld [vmem:[%s1908] sm:$0xff]
  %v1910 = vld [vmem:[%s1908 + $0x8] sm:$0xff]
  %v1911 = vld [vmem:[%s1908 + $0x10] sm:$0xff]
  %v1912 = vld [vmem:[%s1908 + $0x18] sm:$0xff]
  %v1913 = vld [vmem:[%s1908 + $0x20] sm:$0xff]
  %v1914 = vld [vmem:[%s1908 + $0x28] sm:$0xff]
  %v1915 = vld [vmem:[%s1908 + $0x30] sm:$0xff]
  %v1916 = vld [vmem:[%s1908 + $0x38] sm:$0xff]
  %s1917 = scalar_lea.vmem %s15, 1
  %v1918 = vld [vmem:[%s1917] sm:$0x1]
  %v1920 = vlaneseq
  %v1921 = vshrl.u32 %v1920, 7
  %v1922 = vsub.s32 0, %v1921
  %v1923 = vrot.slane %v1918, %v1922
  %v1926 = vsel %vm1024, %v1906, 0
  %v1929 = vsel %vm1024, %v1907, 0
  %1931 = vmatprep.subr.mxu0 0.0
  %1932 = vmatpush1.msra.mxu0 0.0
  %1933 = vmatprep.subr.mxu0 0.0
  %1934 = vmatpush1.msra.mxu0 0.0
  %1935 = vmatprep.subr.mxu0 0.0
  %1936 = vmatpush1.msra.mxu0 0.0
  %1937 = vmatprep.subr.mxu0 0.0
  %1938 = vmatpush1.msra.mxu0 0.0
  %1939 = vmatprep.subr.mxu0 0.0
  %1940 = vmatpush1.msra.mxu0 0.0
  %1941 = vmatprep.subr.mxu0 0.0
  %1942 = vmatpush1.msra.mxu0 0.0
  %1943 = vmatprep.subr.mxu0 0.0
  %1944 = vmatpush1.msra.mxu0 0.0
  %1945 = vmatprep.subr.mxu0 0.0
  %1946 = vmatpush1.msra.mxu0 0.0
  %1947 = vmatprep.subr.mxu0 0.0
  %1948 = vmatpush1.msra.mxu0 %v1916
  %1949 = vmatprep.subr.mxu0 0.0
  %1950 = vmatpush1.msra.mxu0 %v1915
  %1951 = vmatprep.subr.mxu0 0.0
  %1952 = vmatpush1.msra.mxu0 %v1914
  %1953 = vmatprep.subr.mxu0 0.0
  %1954 = vmatpush1.msra.mxu0 %v1913
  %1955 = vmatprep.subr.mxu0 0.0
  %1956 = vmatpush1.msra.mxu0 %v1912
  %1957 = vmatprep.subr.mxu0 0.0
  %1958 = vmatpush1.msra.mxu0 %v1911
  %1959 = vmatprep.subr.mxu0 0.0
  %1960 = vmatpush1.msra.mxu0 %v1910
  %1961 = vmatprep.subr.mxu0 0.0
  %1962 = vmatpush1.msra.mxu0 %v1909
  %1963 = vmatprep.subr.mxu0 0.0
  %1964 = vmatpush2.msra.mxu0 0.0
  %1965 = vmatprep.subr.mxu0 0.0
  %1966 = vmatpush2.msra.mxu0 0.0
  %1967 = vmatprep.subr.mxu0 0.0
  %1968 = vmatpush2.msra.mxu0 0.0
  %1969 = vmatprep.subr.mxu0 0.0
  %1970 = vmatpush2.msra.mxu0 0.0
  %1971 = vmatprep.subr.mxu0 0.0
  %1972 = vmatpush2.msra.mxu0 0.0
  %1973 = vmatprep.subr.mxu0 0.0
  %1974 = vmatpush2.msra.mxu0 0.0
  %1975 = vmatprep.subr.mxu0 0.0
  %1976 = vmatpush2.msra.mxu0 0.0
  %1977 = vmatprep.subr.mxu0 0.0
  %1978 = vmatpush2.msra.mxu0 0.0
  %1979 = vmatprep.subr.mxu0 0.0
  %1980 = vmatpush2.msra.mxu0 0.0
  %1981 = vmatprep.subr.mxu0 0.0
  %1982 = vmatpush2.msra.mxu0 0.0
  %1983 = vmatprep.subr.mxu0 0.0
  %1984 = vmatpush2.msra.mxu0 0.0
  %1985 = vmatprep.subr.mxu0 0.0
  %1986 = vmatpush2.msra.mxu0 0.0
  %1987 = vmatprep.subr.mxu0 0.0
  %1988 = vmatpush2.msra.mxu0 0.0
  %1989 = vmatprep.subr.mxu0 0.0
  %1990 = vmatpush2.msra.mxu0 0.0
  %1991 = vmatprep.subr.mxu0 0.0
  %1992 = vmatpush2.msra.mxu0 0.0
  %1993 = vmatprep.subr.mxu0 0.0
  %1994 = vmatpush2.msra.mxu0 0.0
  %1995 = vmatprep.mubr.f32.mxu0 0.0
  %1996 = vmatmul.mubr.f32.gmra.mxu0 %v1926
  %v1997 = vpop.f32.mrf.mxu0
  %v1998 = vadd.f32 %v1923, %v1997
  %v1999 = vpop.f32.mrf.mxu0
  %2000 = vmatprep.mubr.f32.mxu0 0.0
  %2001 = vmatmul.mubr.f32.gmra.mxu0 %v1929
  %v2002 = vpop.f32.mrf.mxu0
  %v2003 = vadd.f32 %v1923, %v2002
  %v2004 = vpop.f32.mrf.mxu0
  %2005 = vdwg.mxu0
  %v2006 = vadd.f32 %v1998, %v1794
  %v2007 = vadd.f32 %v2003, %v1795
  %s2008 = scalar_lea.vmem %s16, 1
  %v2009 = vld [vmem:[%s2008] sm:$0x1]
  %s2010 = scalar_lea.vmem %s17, 1
  %v2011 = vld [vmem:[%s2010] sm:$0x1]
  %v2012 = vsel %vm175, %v2006, 0.0
  %2013 = vadd.xlane.f32.xlu0 %v2012
  %v2014 = vpop.xlane.xlu0 %2013
  %v2015 = vsel %vm175, %v2007, 0.0
  %2016 = vadd.xlane.f32.xlu0 %v2015
  %v2017 = vpop.xlane.xlu0 %2016
  %v2018 = vmul.f32 %v2014, %v182
  %v2019 = vmul.f32 %v2017, %v182
  %v2020 = vsub.f32 %v2006, %v2018
  %v2021 = vsub.f32 %v2007, %v2019
  %v2022 = vmul.f32 %v2020, %v2020
  %v2023 = vmul.f32 %v2021, %v2021
  %v2024 = vsel %vm175, %v2022, 0.0
  %2025 = vadd.xlane.f32.xlu0 %v2024
  %v2026 = vpop.xlane.xlu0 %2025
  %v2027 = vsel %vm175, %v2023, 0.0
  %2028 = vadd.xlane.f32.xlu0 %v2027
  %v2029 = vpop.xlane.xlu0 %2028
  %v2030 = vmul.f32 %v2026, %v182
  %v2031 = vmul.f32 %v2029, %v182
  %v2032 = vadd.f32 %v2030, 1e-12
  %v2033 = vadd.f32 %v2031, 1e-12
  %v2034 = vrsqrt.pop %v2032
  %v2035 = vrsqrt.pop %v2033
  %v2036 = vmul.f32 %v2020, %v2034
  %v2037 = vmul.f32 %v2021, %v2035
  %v2039 = vlaneseq
  %v2040 = vshrl.u32 %v2039, 7
  %v2041 = vsub.s32 0, %v2040
  %v2042 = vrot.slane %v2009, %v2041
  %v2044 = vmul.f32 %v2036, %v2042
  %v2045 = vmul.f32 %v2037, %v2042
  %v2047 = vlaneseq
  %v2048 = vshrl.u32 %v2047, 7
  %v2049 = vsub.s32 0, %v2048
  %v2050 = vrot.slane %v2011, %v2049
  %v2052 = vadd.f32 %v2044, %v2050
  %v2053 = vadd.f32 %v2045, %v2050
  %v2055 = vrot.slane %v2053, 7
  %vm2057 = vcmask 1040384
  %v2058 = vsel %vm2057, %v2052, %v2055
  %vm2059 = vcmask 1041408
  %v2060 = vsel %vm2059, %v2058, 0.0
  %v2061 = vld [vmem:[%s18] sm:$0xff]
  %v2062 = vld [vmem:[%s18 + $0x8] sm:$0xff]
  %v2063 = vld [vmem:[%s18 + $0x10] sm:$0xff]
  %v2064 = vld [vmem:[%s18 + $0x18] sm:$0xff]
  %v2065 = vld [vmem:[%s19] sm:$0x1]
  %v2067 = vlaneseq
  %v2068 = vshrl.u32 %v2067, 7
  %v2069 = vsub.s32 0, %v2068
  %v2070 = vrot.slane %v2065, %v2069
  %v2073 = vsel %vm175, %v2060, 0
  %2075 = vmatprep.subr.mxu0 0.0
  %2076 = vmatpush1.msra.mxu0 0.0
  %2077 = vmatprep.subr.mxu0 0.0
  %2078 = vmatpush1.msra.mxu0 0.0
  %2079 = vmatprep.subr.mxu0 0.0
  %2080 = vmatpush1.msra.mxu0 0.0
  %2081 = vmatprep.subr.mxu0 0.0
  %2082 = vmatpush1.msra.mxu0 0.0
  %2083 = vmatprep.subr.mxu0 0.0
  %2084 = vmatpush1.msra.mxu0 0.0
  %2085 = vmatprep.subr.mxu0 0.0
  %2086 = vmatpush1.msra.mxu0 0.0
  %2087 = vmatprep.subr.mxu0 0.0
  %2088 = vmatpush1.msra.mxu0 0.0
  %2089 = vmatprep.subr.mxu0 0.0
  %2090 = vmatpush1.msra.mxu0 0.0
  %2091 = vmatprep.subr.mxu0 0.0
  %2092 = vmatpush1.msra.mxu0 0.0
  %2093 = vmatprep.subr.mxu0 0.0
  %2094 = vmatpush1.msra.mxu0 0.0
  %2095 = vmatprep.subr.mxu0 0.0
  %2096 = vmatpush1.msra.mxu0 0.0
  %2097 = vmatprep.subr.mxu0 0.0
  %2098 = vmatpush1.msra.mxu0 0.0
  %2099 = vmatprep.subr.mxu0 0.0
  %2100 = vmatpush1.msra.mxu0 %v2064
  %2101 = vmatprep.subr.mxu0 0.0
  %2102 = vmatpush1.msra.mxu0 %v2063
  %2103 = vmatprep.subr.mxu0 0.0
  %2104 = vmatpush1.msra.mxu0 %v2062
  %2105 = vmatprep.subr.mxu0 0.0
  %2106 = vmatpush1.msra.mxu0 %v2061
  %2107 = vmatprep.subr.mxu0 0.0
  %2108 = vmatpush2.msra.mxu0 0.0
  %2109 = vmatprep.subr.mxu0 0.0
  %2110 = vmatpush2.msra.mxu0 0.0
  %2111 = vmatprep.subr.mxu0 0.0
  %2112 = vmatpush2.msra.mxu0 0.0
  %2113 = vmatprep.subr.mxu0 0.0
  %2114 = vmatpush2.msra.mxu0 0.0
  %2115 = vmatprep.subr.mxu0 0.0
  %2116 = vmatpush2.msra.mxu0 0.0
  %2117 = vmatprep.subr.mxu0 0.0
  %2118 = vmatpush2.msra.mxu0 0.0
  %2119 = vmatprep.subr.mxu0 0.0
  %2120 = vmatpush2.msra.mxu0 0.0
  %2121 = vmatprep.subr.mxu0 0.0
  %2122 = vmatpush2.msra.mxu0 0.0
  %2123 = vmatprep.subr.mxu0 0.0
  %2124 = vmatpush2.msra.mxu0 0.0
  %2125 = vmatprep.subr.mxu0 0.0
  %2126 = vmatpush2.msra.mxu0 0.0
  %2127 = vmatprep.subr.mxu0 0.0
  %2128 = vmatpush2.msra.mxu0 0.0
  %2129 = vmatprep.subr.mxu0 0.0
  %2130 = vmatpush2.msra.mxu0 0.0
  %2131 = vmatprep.subr.mxu0 0.0
  %2132 = vmatpush2.msra.mxu0 0.0
  %2133 = vmatprep.subr.mxu0 0.0
  %2134 = vmatpush2.msra.mxu0 0.0
  %2135 = vmatprep.subr.mxu0 0.0
  %2136 = vmatpush2.msra.mxu0 0.0
  %2137 = vmatprep.subr.mxu0 0.0
  %2138 = vmatpush2.msra.mxu0 0.0
  %2139 = vmatprep.mubr.f32.mxu0 0.0
  %2140 = vmatmul.mubr.f32.gmra.mxu0 %v2073
  %v2141 = vpop.f32.mrf.mxu0
  %v2142 = vadd.f32 %v2070, %v2141
  %v2143 = vpop.f32.mrf.mxu0
  %2144 = vdwg.mxu0
  %v2145 = vxor.u32 %v2142, 2147483648
  %v2146 = vmul.f32 %v2145, 1.442695
  %v2147 = vpow.pop %v2146
  %v2148 = vadd.f32 %v2147, 1.0
  %v2149 = vrcp.pop %v2148
  %v2150 = vmul.f32 1.0, %v2149
  %2151 = vst [vmem:[%s20] sm:$0xff] %v2150
  // Predicated region
  $region82: #{emotion_classifier_forward.1} parent=0 // pred_check
    _
  $region83: #{emotion_classifier_forward.1} parent=0 // pred_check_branch
    %2153 = sbr.rel (0) target = $region85
  $region84: #{emotion_classifier_forward.1} parent=0 // pred_region
    _
  $region85: #{emotion_classifier_forward.1} parent=0 // pred_fallthru
    _
  // Predicated region
  $region86: #{emotion_classifier_forward.1} parent=0 // pred_check
    _
  $region87: #{emotion_classifier_forward.1} parent=0 // pred_check_branch
    %2155 = sbr.rel (0) target = $region89
  $region88: #{emotion_classifier_forward.1} parent=0 // pred_region
    _
  $region89: #{emotion_classifier_forward.1} parent=0 // pred_fallthru
    _

</llo_original>
